<compile_context>
chip_gen: v5e
topology: v5e:2x2
jax: 0.10.0
libtpu: 0.0.40
codegen_flags: <defaults>
</compile_context>

<pallas_src>
import functools

import jax
import jax.numpy as jnp
from jax.experimental import pallas as pl
from jax.experimental.pallas import tpu as pltpu


def _round_up(v, m):
    return (v + m - 1) // m * m


def _tpu_traits():
    """Chip-aware knobs: (sigmoid dtype, default batch tile, VMEM limit cap)."""
    try:
        kind = jax.devices()[0].device_kind.lower()
    except Exception:  # pragma: no cover - detection failure -> safe defaults
        kind = ""
    old_gen = any(t in kind for t in ("v2", "v3", "v4", "v5"))  # no bf16 EUP/VPU
    v7 = ("v7" in kind) or ("7x" in kind)
    act_dtype = jnp.float32 if old_gen else jnp.bfloat16
    default_bt = 128 if old_gen else 256
    vmem_cap = (48 << 20) if v7 else (96 << 20)
    return act_dtype, default_bt, vmem_cap


def _mlp_decoder_kernel(x_ref,
                        w14_ref, b14_ref,
                        w2_ref, b2_ref,
                        w3_ref, b3_ref,
                        w5_ref, b5_ref,
                        adj_ref, nf_ref, *, act_dtype):
    hidden = w2_ref.shape[0]

    # Explicit bf16 LHS so every dot is a pure bf16 x bf16 MXU op with f32 acc.
    x = x_ref[...].astype(jnp.bfloat16)                          # (bt, in_dim)

    # Fused first layers of fc1/fc2 (shared input): one matmul, one bias add,
    # one sigmoid.  Sigmoid runs in bf16 on v6e/v7x, f32 on v5e.
    y = jnp.dot(x, w14_ref[...], preferred_element_type=jnp.float32) + b14_ref[...]
    y = jax.nn.sigmoid(y.astype(act_dtype))
    h1 = y[:, :hidden].astype(jnp.bfloat16)     # fc1 branch (lane-aligned slice)
    g1 = y[:, hidden:].astype(jnp.bfloat16)     # fc2 branch

    # fc1: Linear(512,512) -> Sigmoid -> Linear(512, adj_pad)
    h2 = jnp.dot(h1, w2_ref[...], preferred_element_type=jnp.float32) + b2_ref[...]
    h2 = jax.nn.sigmoid(h2.astype(act_dtype)).astype(jnp.bfloat16)
    adj_ref[...] = jnp.dot(h2, w3_ref[...],
                           preferred_element_type=jnp.float32) + b3_ref[...]

    # fc2: Linear(512, nf_pad)
    nf_ref[...] = jnp.dot(g1, w5_ref[...],
                          preferred_element_type=jnp.float32) + b5_ref[...]


def pack_mlp_decoder_params(params):
    """One-time packing of the PyTorch-layout params (weights stored (in, out)).

    Concatenates the shared-input first layers (w1||w4), casts weights to
    bf16, zero-pads the output projections to lane-dense (multiple-of-128)
    widths and reshapes biases to (1, N).  Do this at init, not per forward.
    """
    w1, b1, w2, b2, w3, b3, w4, b4, w5, b5 = params
    adj_dim = w3.shape[1]
    nf_dim = w5.shape[1]
    adj_pad = _round_up(adj_dim, 128)
    nf_pad = _round_up(nf_dim, 128)
    packed = {
        "w14": jnp.concatenate([w1, w4], axis=1).astype(jnp.bfloat16),
        "b14": jnp.concatenate([b1, b4], axis=0).reshape(1, -1).astype(jnp.float32),
        "w2": w2.astype(jnp.bfloat16),
        "b2": b2.reshape(1, -1).astype(jnp.float32),
        "w3": jnp.pad(w3, ((0, 0), (0, adj_pad - adj_dim))).astype(jnp.bfloat16),
        "b3": jnp.pad(b3, (0, adj_pad - adj_dim)).reshape(1, -1).astype(jnp.float32),
        "w5": jnp.pad(w5, ((0, 0), (0, nf_pad - nf_dim))).astype(jnp.bfloat16),
        "b5": jnp.pad(b5, (0, nf_pad - nf_dim)).reshape(1, -1).astype(jnp.float32),
    }
    return jax.tree.map(jnp.asarray, packed)


def mlp_decoder_forward(z, packed, *, num_atoms, zdim, num_edge_types,
                        num_node_features, batch_tile=None):
    """z: (B, num_atoms, zdim) float32. Returns (adj, node_features)."""
    B = z.shape[0]
    in_dim = num_atoms * zdim
    adj_dim = num_atoms * num_atoms * num_edge_types
    nf_dim = num_atoms * num_node_features

    w14, b14 = packed["w14"], packed["b14"]
    w2b, b2r = packed["w2"], packed["b2"]
    w3p, b3p = packed["w3"], packed["b3"]
    w5p, b5p = packed["w5"], packed["b5"]
    hidden = w2b.shape[0]
    adj_pad = w3p.shape[1]
    nf_pad = w5p.shape[1]
    assert w14.shape == (in_dim, 2 * hidden)
    assert adj_pad >= adj_dim and nf_pad >= nf_dim

    act_dtype, default_bt, vmem_cap = _tpu_traits()
    if batch_tile is None:
        batch_tile = default_bt

    x = jnp.reshape(z, (B, in_dim)).astype(jnp.float32)

    # Batch tiling: sublane-aligned tile.  Small batches stay grid=(1,) (no
    # megacore split -> the ~1 MB weight DMA is not duplicated per core);
    # large batches get >= 2 tiles which the "parallel" axis shards across
    # v7x's two TensorCores.
    bt = min(batch_tile, _round_up(B, 8))
    Bp = _round_up(B, bt)
    if Bp != B:
        x = jnp.pad(x, ((0, Bp - B), (0, 0)))
    grid = (Bp // bt,)

    # Cost estimate: helps XLA schedule around this latency-/DMA-bound call.
    flops = 2 * Bp * (in_dim * 2 * hidden + hidden * hidden
                      + hidden * adj_pad + hidden * nf_pad)
    transcendentals = Bp * 3 * hidden
    weight_bytes = 2 * (w14.size + w2b.size + w3p.size + w5p.size)     # bf16
    bias_bytes = 4 * (b14.size + b2r.size + b3p.size + b5p.size)       # f32
    io_bytes = 4 * (Bp * in_dim + Bp * (adj_pad + nf_pad))
    cost = pl.CostEstimate(flops=int(flops),
                           transcendentals=int(transcendentals),
                           bytes_accessed=int(weight_bytes + bias_bytes + io_bytes))

    # Explicit VMEM budget (guards scaling of adj_dim); chip-aware cap.
    block_io_bytes = 4 * bt * (in_dim + adj_pad + nf_pad + 3 * hidden)
    vmem_need = 2 * (weight_bytes + bias_bytes) + 2 * block_io_bytes + (1 << 20)
    vmem_limit = int(min(max(vmem_need, 16 << 20), vmem_cap))

    compiler_params = pltpu.CompilerParams(
        dimension_semantics=("parallel",),   # v7x: 2 TCs split the batch grid
        vmem_limit_bytes=vmem_limit,
    )

    def batch_idx(i):
        return (i, 0)

    def resident_idx(i):
        return (0, 0)          # weights/biases stay resident in VMEM

    in_specs = [
        pl.BlockSpec((bt, in_dim), batch_idx),
        pl.BlockSpec(w14.shape, resident_idx),
        pl.BlockSpec(b14.shape, resident_idx),
        pl.BlockSpec(w2b.shape, resident_idx),
        pl.BlockSpec(b2r.shape, resident_idx),
        pl.BlockSpec(w3p.shape, resident_idx),
        pl.BlockSpec(b3p.shape, resident_idx),
        pl.BlockSpec(w5p.shape, resident_idx),
        pl.BlockSpec(b5p.shape, resident_idx),
    ]
    out_specs = (
        pl.BlockSpec((bt, adj_pad), batch_idx),
        pl.BlockSpec((bt, nf_pad), batch_idx),
    )

    kernel = functools.partial(_mlp_decoder_kernel, act_dtype=act_dtype)

    adj_flat, nf_flat = pl.pallas_call(
        kernel,
        out_shape=(
            jax.ShapeDtypeStruct((Bp, adj_pad), jnp.float32),
            jax.ShapeDtypeStruct((Bp, nf_pad), jnp.float32),
        ),
        grid=grid,
        in_specs=in_specs,
        out_specs=out_specs,
        compiler_params=compiler_params,
        cost_estimate=cost,
    )(x, w14, b14, w2b, b2r, w3p, b3p, w5p, b5p)

    adj = adj_flat[:B, :adj_dim].reshape(B, num_atoms, num_atoms, num_edge_types)
    node_features = nf_flat[:B, :nf_dim].reshape(B, num_atoms, num_node_features)
    return adj, node_features


def init_params(key, *, num_atoms, zdim, num_edge_types, num_node_features,
                hidden=512):
    """Deterministic synthetic parameter init (weights stored as (in, out))."""
    in_dim = num_atoms * zdim
    adj_dim = num_atoms * num_atoms * num_edge_types
    nf_dim = num_atoms * num_node_features

    shapes = [
        (in_dim, hidden), (hidden,),     # fc1 layer 0
        (hidden, hidden), (hidden,),     # fc1 layer 2
        (hidden, adj_dim), (adj_dim,),   # fc1 layer 4
        (in_dim, hidden), (hidden,),     # fc2 layer 0
        (hidden, nf_dim), (nf_dim,),     # fc2 layer 2
    ]
    keys = jax.random.split(key, len(shapes))
    params = []
    for k, s in zip(keys, shapes):
        fan_in = s[0]
        scale = 1.0 / jnp.sqrt(jnp.float32(fan_in))
        params.append(jax.random.uniform(k, s, jnp.float32, -scale, scale))
    return tuple(params)


if __name__ == "__main__":
    num_atoms = 8
    zdim = 4
    num_edge_types = 4
    num_node_features = 8
    batch = 2

    key = jax.random.PRNGKey(0)
    kz, kp = jax.random.split(key)
    z = jax.random.normal(kz, (batch, num_atoms, zdim), jnp.float32)
    params = init_params(kp, num_atoms=num_atoms, zdim=zdim,
                         num_edge_types=num_edge_types,
                         num_node_features=num_node_features)

    # One-time weight packing (hoisted out of the forward path).
    packed = pack_mlp_decoder_params(params)
    act_dtype, _, _ = _tpu_traits()

    adj, node_features = mlp_decoder_forward(
        z, packed, num_atoms=num_atoms, zdim=zdim,
        num_edge_types=num_edge_types, num_node_features=num_node_features)
    jax.block_until_ready((adj, node_features))

    assert adj.shape == (batch, num_atoms, num_atoms, num_edge_types)
    assert node_features.shape == (batch, num_atoms, num_node_features)

    # Reference 1: mirrors the kernel numerics exactly (bf16 weights, bf16
    # activations on the MXU, f32 accumulation, chip-matched sigmoid dtype).
    def reference_mirror(zz, prm):
        Bt = zz.shape[0]
        w1, b1, w2, b2, w3, b3, w4, b4, w5, b5 = prm
        bf = lambda a: a.astype(jnp.bfloat16)
        dot = lambda a, b: jnp.dot(bf(a), bf(b), preferred_element_type=jnp.float32)
        sig = lambda t: jax.nn.sigmoid(t.astype(act_dtype)).astype(jnp.float32)
        xx = zz.reshape(Bt, num_atoms * zdim).astype(jnp.float32)
        h = sig(dot(xx, w1) + b1)
        h = sig(dot(h, w2) + b2)
        adj_r = (dot(h, w3) + b3).reshape(Bt, num_atoms, num_atoms, num_edge_types)
        g = sig(dot(xx, w4) + b4)
        nf_r = (dot(g, w5) + b5).reshape(Bt, num_atoms, num_node_features)
        return adj_r, nf_r

    # Reference 2: plain f32 (faithful to the PyTorch module's default math).
    def reference_f32(zz, prm):
        Bt = zz.shape[0]
        w1, b1, w2, b2, w3, b3, w4, b4, w5, b5 = prm
        xx = zz.reshape(Bt, num_atoms * zdim)
        with jax.default_matmul_precision("highest"):
            h = jax.nn.sigmoid(xx @ w1 + b1)
            h = jax.nn.sigmoid(h @ w2 + b2)
            adj_r = (h @ w3 + b3).reshape(Bt, num_atoms, num_atoms, num_edge_types)
            g = jax.nn.sigmoid(xx @ w4 + b4)
            nf_r = (g @ w5 + b5).reshape(Bt, num_atoms, num_node_features)
        return adj_r, nf_r

    adj_m, nf_m = reference_mirror(z, params)
    assert jnp.allclose(adj, adj_m, atol=1e-2, rtol=1e-2), \
        float(jnp.max(jnp.abs(adj - adj_m)))
    assert jnp.allclose(node_features, nf_m, atol=1e-2, rtol=1e-2), \
        float(jnp.max(jnp.abs(node_features - nf_m)))

    adj_f, nf_f = reference_f32(z, params)
    assert jnp.allclose(adj, adj_f, atol=3e-2, rtol=3e-2), \
        float(jnp.max(jnp.abs(adj - adj_f)))
    assert jnp.allclose(node_features, nf_f, atol=3e-2, rtol=3e-2), \
        float(jnp.max(jnp.abs(node_features - nf_f)))

    # Also exercise the multi-step batch grid + padding path (B=20, tile=8).
    # (Tiny tile is purely a functional test of the grid path, not a perf mode.)
    z_big = jax.random.normal(jax.random.PRNGKey(1),
                              (20, num_atoms, zdim), jnp.float32)
    adj_b, nf_b = mlp_decoder_forward(
        z_big, packed, num_atoms=num_atoms, zdim=zdim,
        num_edge_types=num_edge_types, num_node_features=num_node_features,
        batch_tile=8)
    jax.block_until_ready((adj_b, nf_b))
    adj_bm, nf_bm = reference_mirror(z_big, params)
    assert jnp.allclose(adj_b, adj_bm, atol=1e-2, rtol=1e-2)
    assert jnp.allclose(nf_b, nf_bm, atol=1e-2, rtol=1e-2)

    print("KERNEL_OK")
</pallas_src>

<mosaic_0001>
module attributes {stable_mosaic.version = 11 : i64} {
  func.func @_mlp_decoder_kernel(%arg0: i32, %arg1: memref<8x32xf32, #tpu.memory_space<vmem>>, %arg2: memref<32x1024xbf16, #tpu.memory_space<vmem>>, %arg3: memref<1x1024xf32, #tpu.memory_space<vmem>>, %arg4: memref<512x512xbf16, #tpu.memory_space<vmem>>, %arg5: memref<1x512xf32, #tpu.memory_space<vmem>>, %arg6: memref<512x256xbf16, #tpu.memory_space<vmem>>, %arg7: memref<1x256xf32, #tpu.memory_space<vmem>>, %arg8: memref<512x128xbf16, #tpu.memory_space<vmem>>, %arg9: memref<1x128xf32, #tpu.memory_space<vmem>>, %arg10: memref<8x256xf32, #tpu.memory_space<vmem>>, %arg11: memref<8x128xf32, #tpu.memory_space<vmem>>) attributes {dimension_semantics = [#tpu.dimension_semantics<parallel>], iteration_bounds = array<i64: 1>, scalar_prefetch = 0 : i64, scratch_operands = 0 : i64, tpu.core_type = #tpu.core_type<tc>, window_params = [{transform_indices = @transform_0, window_bounds = array<i64: 8, 32>}, {pipeline_mode = #tpu.pipeline_mode<synchronous>, transform_indices = @transform_1, window_bounds = array<i64: 32, 1024>}, {pipeline_mode = #tpu.pipeline_mode<synchronous>, transform_indices = @transform_2, window_bounds = array<i64: 1, 1024>}, {pipeline_mode = #tpu.pipeline_mode<synchronous>, transform_indices = @transform_3, window_bounds = array<i64: 512, 512>}, {pipeline_mode = #tpu.pipeline_mode<synchronous>, transform_indices = @transform_4, window_bounds = array<i64: 1, 512>}, {pipeline_mode = #tpu.pipeline_mode<synchronous>, transform_indices = @transform_5, window_bounds = array<i64: 512, 256>}, {pipeline_mode = #tpu.pipeline_mode<synchronous>, transform_indices = @transform_6, window_bounds = array<i64: 1, 256>}, {pipeline_mode = #tpu.pipeline_mode<synchronous>, transform_indices = @transform_7, window_bounds = array<i64: 512, 128>}, {pipeline_mode = #tpu.pipeline_mode<synchronous>, transform_indices = @transform_8, window_bounds = array<i64: 1, 128>}, {transform_indices = @transform_9, window_bounds = array<i64: 8, 256>}, {transform_indices = @transform_10, window_bounds = array<i64: 8, 128>}]} {
    %c0 = arith.constant 0 : index
    %c0_0 = arith.constant 0 : index
    %0 = vector.load %arg1[%c0, %c0_0] : memref<8x32xf32, #tpu.memory_space<vmem>>, vector<8x32xf32>
    %1 = arith.truncf %0 : vector<8x32xf32> to vector<8x32xbf16>
    %c0_1 = arith.constant 0 : index
    %c0_2 = arith.constant 0 : index
    %2 = vector.load %arg2[%c0_1, %c0_2] : memref<32x1024xbf16, #tpu.memory_space<vmem>>, vector<32x1024xbf16>
    %cst = arith.constant dense<0.000000e+00> : vector<8x1024xf32>
    %3 = tpu.matmul %1, %2, %cst {dimension_numbers = #tpu.dot_dimension_numbers<[1], [0], [0], [1], [0, 0, 1, 1], [], []>} : vector<8x32xbf16>, vector<32x1024xbf16>, vector<8x1024xf32> -> vector<8x1024xf32>
    %c0_3 = arith.constant 0 : index
    %c0_4 = arith.constant 0 : index
    %4 = vector.load %arg3[%c0_3, %c0_4] : memref<1x1024xf32, #tpu.memory_space<vmem>>, vector<1x1024xf32>
    %5 = vector.broadcast %4 : vector<1x1024xf32> to vector<8x1024xf32>
    %6 = arith.addf %3, %5 : vector<8x1024xf32>
    %7 = arith.truncf %6 : vector<8x1024xf32> to vector<8x1024xbf16>
    %8 = arith.negf %7 : vector<8x1024xbf16>
    %9 = math.exp %8 : vector<8x1024xbf16>
    %cst_5 = arith.constant 1.000000e+00 : bf16
    %10 = vector.broadcast %cst_5 : bf16 to vector<8x1024xbf16>
    %11 = arith.addf %10, %9 : vector<8x1024xbf16>
    %12 = arith.divf %10, %11 : vector<8x1024xbf16>
    %13 = vector.extract_strided_slice %12 {offsets = [0, 0], sizes = [8, 512], strides = [1, 1]} : vector<8x1024xbf16> to vector<8x512xbf16>
    %14 = vector.extract_strided_slice %12 {offsets = [0, 512], sizes = [8, 512], strides = [1, 1]} : vector<8x1024xbf16> to vector<8x512xbf16>
    %c0_6 = arith.constant 0 : index
    %c0_7 = arith.constant 0 : index
    %15 = vector.load %arg4[%c0_6, %c0_7] : memref<512x512xbf16, #tpu.memory_space<vmem>>, vector<512x512xbf16>
    %cst_8 = arith.constant dense<0.000000e+00> : vector<8x512xf32>
    %16 = tpu.matmul %13, %15, %cst_8 {dimension_numbers = #tpu.dot_dimension_numbers<[1], [0], [0], [1], [0, 0, 1, 1], [], []>} : vector<8x512xbf16>, vector<512x512xbf16>, vector<8x512xf32> -> vector<8x512xf32>
    %c0_9 = arith.constant 0 : index
    %c0_10 = arith.constant 0 : index
    %17 = vector.load %arg5[%c0_9, %c0_10] : memref<1x512xf32, #tpu.memory_space<vmem>>, vector<1x512xf32>
    %18 = vector.broadcast %17 : vector<1x512xf32> to vector<8x512xf32>
    %19 = arith.addf %16, %18 : vector<8x512xf32>
    %20 = arith.truncf %19 : vector<8x512xf32> to vector<8x512xbf16>
    %21 = arith.negf %20 : vector<8x512xbf16>
    %22 = math.exp %21 : vector<8x512xbf16>
    %cst_11 = arith.constant 1.000000e+00 : bf16
    %23 = vector.broadcast %cst_11 : bf16 to vector<8x512xbf16>
    %24 = arith.addf %23, %22 : vector<8x512xbf16>
    %25 = arith.divf %23, %24 : vector<8x512xbf16>
    %c0_12 = arith.constant 0 : index
    %c0_13 = arith.constant 0 : index
    %26 = vector.load %arg6[%c0_12, %c0_13] : memref<512x256xbf16, #tpu.memory_space<vmem>>, vector<512x256xbf16>
    %cst_14 = arith.constant dense<0.000000e+00> : vector<8x256xf32>
    %27 = tpu.matmul %25, %26, %cst_14 {dimension_numbers = #tpu.dot_dimension_numbers<[1], [0], [0], [1], [0, 0, 1, 1], [], []>} : vector<8x512xbf16>, vector<512x256xbf16>, vector<8x256xf32> -> vector<8x256xf32>
    %c0_15 = arith.constant 0 : index
    %c0_16 = arith.constant 0 : index
    %28 = vector.load %arg7[%c0_15, %c0_16] : memref<1x256xf32, #tpu.memory_space<vmem>>, vector<1x256xf32>
    %29 = vector.broadcast %28 : vector<1x256xf32> to vector<8x256xf32>
    %30 = arith.addf %27, %29 : vector<8x256xf32>
    %c0_17 = arith.constant 0 : index
    %c0_18 = arith.constant 0 : index
    %31 = vector.load %arg10[%c0_17, %c0_18] : memref<8x256xf32, #tpu.memory_space<vmem>>, vector<8x256xf32>
    tpu.vector_store %arg10[%c0_17, %c0_18], %30 {strides = array<i32>} : memref<8x256xf32, #tpu.memory_space<vmem>>, vector<8x256xf32>,
    %c0_19 = arith.constant 0 : index
    %c0_20 = arith.constant 0 : index
    %32 = vector.load %arg8[%c0_19, %c0_20] : memref<512x128xbf16, #tpu.memory_space<vmem>>, vector<512x128xbf16>
    %cst_21 = arith.constant dense<0.000000e+00> : vector<8x128xf32>
    %33 = tpu.matmul %14, %32, %cst_21 {dimension_numbers = #tpu.dot_dimension_numbers<[1], [0], [0], [1], [0, 0, 1, 1], [], []>} : vector<8x512xbf16>, vector<512x128xbf16>, vector<8x128xf32> -> vector<8x128xf32>
    %c0_22 = arith.constant 0 : index
    %c0_23 = arith.constant 0 : index
    %34 = vector.load %arg9[%c0_22, %c0_23] : memref<1x128xf32, #tpu.memory_space<vmem>>, vector<1x128xf32>
    %35 = vector.broadcast %34 : vector<1x128xf32> to vector<8x128xf32>
    %36 = arith.addf %33, %35 : vector<8x128xf32>
    %c0_24 = arith.constant 0 : index
    %c0_25 = arith.constant 0 : index
    %37 = vector.load %arg11[%c0_24, %c0_25] : memref<8x128xf32, #tpu.memory_space<vmem>>, vector<8x128xf32>
    tpu.vector_store %arg11[%c0_24, %c0_25], %36 {strides = array<i32>} : memref<8x128xf32, #tpu.memory_space<vmem>>, vector<8x128xf32>,
    return
  }
  func.func @transform_0(%arg0: i32) -> (i32, i32) {
    %c0_i32 = arith.constant 0 : i32
    %c0_i32_0 = arith.constant 0 : i32
    return %arg0, %c0_i32 : i32, i32
  }
  func.func @transform_1(%arg0: i32) -> (i32, i32) {
    %c0_i32 = arith.constant 0 : i32
    %c0_i32_0 = arith.constant 0 : i32
    %c0_i32_1 = arith.constant 0 : i32
    return %c0_i32, %c0_i32_0 : i32, i32
  }
  func.func @transform_2(%arg0: i32) -> (i32, i32) {
    %c0_i32 = arith.constant 0 : i32
    %c0_i32_0 = arith.constant 0 : i32
    %c0_i32_1 = arith.constant 0 : i32
    return %c0_i32, %c0_i32_0 : i32, i32
  }
  func.func @transform_3(%arg0: i32) -> (i32, i32) {
    %c0_i32 = arith.constant 0 : i32
    %c0_i32_0 = arith.constant 0 : i32
    %c0_i32_1 = arith.constant 0 : i32
    return %c0_i32, %c0_i32_0 : i32, i32
  }
  func.func @transform_4(%arg0: i32) -> (i32, i32) {
    %c0_i32 = arith.constant 0 : i32
    %c0_i32_0 = arith.constant 0 : i32
    %c0_i32_1 = arith.constant 0 : i32
    return %c0_i32, %c0_i32_0 : i32, i32
  }
  func.func @transform_5(%arg0: i32) -> (i32, i32) {
    %c0_i32 = arith.constant 0 : i32
    %c0_i32_0 = arith.constant 0 : i32
    %c0_i32_1 = arith.constant 0 : i32
    return %c0_i32, %c0_i32_0 : i32, i32
  }
  func.func @transform_6(%arg0: i32) -> (i32, i32) {
    %c0_i32 = arith.constant 0 : i32
    %c0_i32_0 = arith.constant 0 : i32
    %c0_i32_1 = arith.constant 0 : i32
    return %c0_i32, %c0_i32_0 : i32, i32
  }
  func.func @transform_7(%arg0: i32) -> (i32, i32) {
    %c0_i32 = arith.constant 0 : i32
    %c0_i32_0 = arith.constant 0 : i32
    %c0_i32_1 = arith.constant 0 : i32
    return %c0_i32, %c0_i32_0 : i32, i32
  }
  func.func @transform_8(%arg0: i32) -> (i32, i32) {
    %c0_i32 = arith.constant 0 : i32
    %c0_i32_0 = arith.constant 0 : i32
    %c0_i32_1 = arith.constant 0 : i32
    return %c0_i32, %c0_i32_0 : i32, i32
  }
  func.func @transform_9(%arg0: i32) -> (i32, i32) {
    %c0_i32 = arith.constant 0 : i32
    %c0_i32_0 = arith.constant 0 : i32
    return %arg0, %c0_i32 : i32, i32
  }
  func.func @transform_10(%arg0: i32) -> (i32, i32) {
    %c0_i32 = arith.constant 0 : i32
    %c0_i32_0 = arith.constant 0 : i32
    return %arg0, %c0_i32 : i32, i32
  }
}

</mosaic_0001>

<llo_original>
// kernel: tpu_custom_call.1
$region0: #{tpu_custom_call.1}
  #allocation0 [shape = 'u32[]', space=smem, size = 0x4, offset = 0x4, fixed_abs, tag = 'smem constant byte address 0x4 - core index']
  #allocation1 [shape = 'u32[72,128]{1,0:T(1,128)}', space=vmem, size = 0x9000, scoped, tag = 'internal scratch']
  %s0 = inlined_call_operand.hbm [shape: f32[8,32], index: 0, kind: input, shape index: {}]
  %s1 = inlined_call_operand.hbm [shape: bf16[32,1024], index: 1, kind: input, shape index: {}]
  %s2 = inlined_call_operand.hbm [shape: f32[1,1024], index: 2, kind: input, shape index: {}]
  %s3 = inlined_call_operand.hbm [shape: bf16[512,512], index: 3, kind: input, shape index: {}]
  %s4 = inlined_call_operand.hbm [shape: f32[1,512], index: 4, kind: input, shape index: {}]
  %s5 = inlined_call_operand.hbm [shape: bf16[512,256], index: 5, kind: input, shape index: {}]
  %s6 = inlined_call_operand.vmem [shape: f32[1,256], index: 6, kind: input, shape index: {}]
  %s7 = inlined_call_operand.hbm [shape: bf16[512,128], index: 7, kind: input, shape index: {}]
  %s8 = inlined_call_operand.vmem [shape: f32[1,128], index: 8, kind: input, shape index: {}]
  %s9 = inlined_call_operand.hbm [shape: f32[8,256], index: 9, kind: output, shape index: {0}]
  %s10 = inlined_call_operand.hbm [shape: f32[8,128], index: 10, kind: output, shape index: {1}]
  %11 = xla_tuple %s9, %s10
  %s12 = sld [smem:[#allocation0]]
  $region82: #{tpu_custom_call.1} parent=0
    _
  %s14 = ssub.s32 1, %s12
  %s15 = scalar_select 0, %s14, %s12
  $region1: #{tpu_custom_call.1} parent=0
    #allocation2 [shape = 'u8[4096]{0}', space=vmem, size = 0x1000, scoped, tag = 'input window, operand 0, single buffered']
    #allocation3 [shape = 's32[1]{0}', space=sflag, size = 0x4, scoped, tag = 'scoped memory for tpu_custom_call.1']
    #allocation4 [shape = 's32[1]{0}', space=sflag, size = 0x4, scoped, tag = 'scoped memory for tpu_custom_call.1']
    #allocation5 [shape = 'u8[65536]{0}', space=vmem, size = 0x10000, scoped, tag = 'input window, operand 1, single buffered']
    #allocation6 [shape = 's32[1]{0}', space=sflag, size = 0x4, scoped, tag = 'scoped memory for tpu_custom_call.1']
    #allocation7 [shape = 'u8[4096]{0}', space=vmem, size = 0x1000, scoped, tag = 'input window, operand 2, single buffered']
    #allocation8 [shape = 'u8[524288]{0}', space=vmem, size = 0x80000, scoped, tag = 'input window, operand 3, single buffered']
    #allocation9 [shape = 's32[1]{0}', space=sflag, size = 0x4, scoped, tag = 'scoped memory for tpu_custom_call.1']
    #allocation10 [shape = 'u8[2048]{0}', space=vmem, size = 0x800, scoped, tag = 'input window, operand 4, single buffered']
    #allocation11 [shape = 'u8[262144]{0}', space=vmem, size = 0x40000, scoped, tag = 'input window, operand 5, single buffered']
    #allocation12 [shape = 's32[1]{0}', space=sflag, size = 0x4, scoped, tag = 'scoped memory for tpu_custom_call.1']
    #allocation13 [shape = 'u8[131072]{0}', space=vmem, size = 0x20000, scoped, tag = 'input window, operand 7, single buffered']
    #allocation14 [shape = 'u8[8192]{0}', space=vmem, size = 0x2000, scoped, tag = 'output window, operand 0, single buffered']
    #allocation15 [shape = 'u8[4096]{0}', space=vmem, size = 0x1000, scoped, tag = 'output window, operand 1, single buffered']
    #allocation16 [shape = 's32[1]{0}', space=sflag, size = 0x4, scoped, tag = 'scoped memory for tpu_custom_call.1']
    %16 = vsyncpa [#allocation3], 0
    %17 = vsyncpa [#allocation6], 0
    %18 = vsyncpa [#allocation9], 0
    %19 = vsyncpa [#allocation12], 0
    %20 = vsyncpa [#allocation4], 0
    %21 = vsyncpa [#allocation16], 0
    // Predicated region
    $region2: #{tpu_custom_call.1} parent=1 // pred_check
      _
    $region3: #{tpu_custom_call.1} parent=1 // pred_check_branch
      %23 = sbr.rel (0) target = $region5
    $region4: #{tpu_custom_call.1} parent=1 // pred_region
      %25 = vsyncadd [#allocation3], 0
      %s27 = sshll.u32 %s0, 4
      %s28 = int_to_ptr.hbm [resolvable:$true] %s27
      %s29 = sshll.u32 [#allocation2], 4
      %s30 = int_to_ptr.vmem [resolvable:$true] %s29
      %32 = dma.hbm_to_vmem [thread:$0]  %s28, 128, %s30, [#allocation3]
    $region5: #{tpu_custom_call.1} parent=1 // pred_fallthru
      _
    // Predicated region
    $region6: #{tpu_custom_call.1} parent=1 // pred_check
      _
    $region7: #{tpu_custom_call.1} parent=1 // pred_check_branch
      %34 = sbr.rel (0) target = $region9
    $region8: #{tpu_custom_call.1} parent=1 // pred_region
      %36 = vsyncadd [#allocation6], 0
      %s37 = sshll.u32 %s1, 4
      %s38 = int_to_ptr.hbm [resolvable:$true] %s37
      %s39 = sshll.u32 [#allocation5], 4
      %s40 = int_to_ptr.vmem [resolvable:$true] %s39
      %45 = dma.hbm_to_vmem [thread:$0]  %s38, 2048, %s40, [#allocation6], 512, 512, 32
    $region9: #{tpu_custom_call.1} parent=1 // pred_fallthru
      _
    // Predicated region
    $region10: #{tpu_custom_call.1} parent=1 // pred_check
      _
    $region11: #{tpu_custom_call.1} parent=1 // pred_check_branch
      %47 = sbr.rel (0) target = $region13
    $region12: #{tpu_custom_call.1} parent=1 // pred_region
      %49 = vsyncadd [#allocation6], 0
      %s51 = sshll.u32 %s2, 4
      %s52 = int_to_ptr.hbm [resolvable:$true] %s51
      %s53 = sshll.u32 [#allocation7], 4
      %s54 = int_to_ptr.vmem [resolvable:$true] %s53
      %56 = dma.hbm_to_vmem [thread:$0]  %s52, 128, %s54, [#allocation6]
    $region13: #{tpu_custom_call.1} parent=1 // pred_fallthru
      _
    // Predicated region
    $region14: #{tpu_custom_call.1} parent=1 // pred_check
      _
    $region15: #{tpu_custom_call.1} parent=1 // pred_check_branch
      %58 = sbr.rel (0) target = $region17
    $region16: #{tpu_custom_call.1} parent=1 // pred_region
      %60 = vsyncadd [#allocation9], 0
      %s61 = sshll.u32 %s3, 4
      %s62 = int_to_ptr.hbm [resolvable:$true] %s61
      %s63 = sshll.u32 [#allocation8], 4
      %s64 = int_to_ptr.vmem [resolvable:$true] %s63
      %69 = dma.hbm_to_vmem [thread:$0]  %s62, 16384, %s64, [#allocation9], 256, 256, 16
    $region17: #{tpu_custom_call.1} parent=1 // pred_fallthru
      _
    // Predicated region
    $region18: #{tpu_custom_call.1} parent=1 // pred_check
      _
    $region19: #{tpu_custom_call.1} parent=1 // pred_check_branch
      %71 = sbr.rel (0) target = $region21
    $region20: #{tpu_custom_call.1} parent=1 // pred_region
      %73 = vsyncadd [#allocation9], 0
      %s75 = sshll.u32 %s4, 4
      %s76 = int_to_ptr.hbm [resolvable:$true] %s75
      %s77 = sshll.u32 [#allocation10], 4
      %s78 = int_to_ptr.vmem [resolvable:$true] %s77
      %80 = dma.hbm_to_vmem [thread:$0]  %s76, 64, %s78, [#allocation9]
    $region21: #{tpu_custom_call.1} parent=1 // pred_fallthru
      _
    // Predicated region
    $region22: #{tpu_custom_call.1} parent=1 // pred_check
      _
    $region23: #{tpu_custom_call.1} parent=1 // pred_check_branch
      %82 = sbr.rel (0) target = $region25
    $region24: #{tpu_custom_call.1} parent=1 // pred_region
      %84 = vsyncadd [#allocation12], 0
      %s85 = sshll.u32 %s5, 4
      %s86 = int_to_ptr.hbm [resolvable:$true] %s85
      %s87 = sshll.u32 [#allocation11], 4
      %s88 = int_to_ptr.vmem [resolvable:$true] %s87
      %93 = dma.hbm_to_vmem [thread:$0]  %s86, 8192, %s88, [#allocation12], 128, 128, 8
    $region25: #{tpu_custom_call.1} parent=1 // pred_fallthru
      _
    // Predicated region
    $region26: #{tpu_custom_call.1} parent=1 // pred_check
      _
    $region27: #{tpu_custom_call.1} parent=1 // pred_check_branch
      %95 = sbr.rel (0) target = $region29
    $region28: #{tpu_custom_call.1} parent=1 // pred_region
      _
    $region29: #{tpu_custom_call.1} parent=1 // pred_fallthru
      _
    // Predicated region
    $region30: #{tpu_custom_call.1} parent=1 // pred_check
      _
    $region31: #{tpu_custom_call.1} parent=1 // pred_check_branch
      %97 = sbr.rel (0) target = $region33
    $region32: #{tpu_custom_call.1} parent=1 // pred_region
      %99 = vsyncadd [#allocation12], 0
      %s100 = sshll.u32 %s7, 4
      %s101 = int_to_ptr.hbm [resolvable:$true] %s100
      %s102 = sshll.u32 [#allocation13], 4
      %s103 = int_to_ptr.vmem [resolvable:$true] %s102
      %108 = dma.hbm_to_vmem [thread:$0]  %s101, 4096, %s103, [#allocation12], 64, 64, 4
    $region33: #{tpu_custom_call.1} parent=1 // pred_fallthru
      _
    // Predicated region
    $region34: #{tpu_custom_call.1} parent=1 // pred_check
      _
    $region35: #{tpu_custom_call.1} parent=1 // pred_check_branch
      %110 = sbr.rel (0) target = $region37
    $region36: #{tpu_custom_call.1} parent=1 // pred_region
      _
    $region37: #{tpu_custom_call.1} parent=1 // pred_fallthru
      _
    // Predicated region
    $region38: #{tpu_custom_call.1} parent=1 // pred_check
      _
    $region39: #{tpu_custom_call.1} parent=1 // pred_check_branch
      %112 = sbr.rel (0) target = $region41
    $region40: #{tpu_custom_call.1} parent=1 // pred_region
      %114 = dma.done [#allocation3], 128
    $region41: #{tpu_custom_call.1} parent=1 // pred_fallthru
      _
    // Predicated region
    $region42: #{tpu_custom_call.1} parent=1 // pred_check
      _
    $region43: #{tpu_custom_call.1} parent=1 // pred_check_branch
      %116 = sbr.rel (0) target = $region45
    $region44: #{tpu_custom_call.1} parent=1 // pred_region
      %118 = dma.done [#allocation6], 2048
    $region45: #{tpu_custom_call.1} parent=1 // pred_fallthru
      _
    // Predicated region
    $region46: #{tpu_custom_call.1} parent=1 // pred_check
      _
    $region47: #{tpu_custom_call.1} parent=1 // pred_check_branch
      %120 = sbr.rel (0) target = $region49
    $region48: #{tpu_custom_call.1} parent=1 // pred_region
      %122 = dma.done [#allocation6], 128
    $region49: #{tpu_custom_call.1} parent=1 // pred_fallthru
      _
    // Predicated region
    $region50: #{tpu_custom_call.1} parent=1 // pred_check
      _
    $region51: #{tpu_custom_call.1} parent=1 // pred_check_branch
      %124 = sbr.rel (0) target = $region53
    $region52: #{tpu_custom_call.1} parent=1 // pred_region
      %126 = dma.done [#allocation9], 16384
    $region53: #{tpu_custom_call.1} parent=1 // pred_fallthru
      _
    // Predicated region
    $region54: #{tpu_custom_call.1} parent=1 // pred_check
      _
    $region55: #{tpu_custom_call.1} parent=1 // pred_check_branch
      %128 = sbr.rel (0) target = $region57
    $region56: #{tpu_custom_call.1} parent=1 // pred_region
      %130 = dma.done [#allocation9], 64
    $region57: #{tpu_custom_call.1} parent=1 // pred_fallthru
      _
    // Predicated region
    $region58: #{tpu_custom_call.1} parent=1 // pred_check
      _
    $region59: #{tpu_custom_call.1} parent=1 // pred_check_branch
      %132 = sbr.rel (0) target = $region61
    $region60: #{tpu_custom_call.1} parent=1 // pred_region
      %134 = dma.done [#allocation12], 8192
    $region61: #{tpu_custom_call.1} parent=1 // pred_fallthru
      _
    // Predicated region
    $region62: #{tpu_custom_call.1} parent=1 // pred_check
      _
    $region63: #{tpu_custom_call.1} parent=1 // pred_check_branch
      %136 = sbr.rel (0) target = $region65
    $region64: #{tpu_custom_call.1} parent=1 // pred_region
      %138 = dma.done [#allocation12], 4096
    $region65: #{tpu_custom_call.1} parent=1 // pred_fallthru
      _
    %v141 = vld [vmem:[#allocation2] sm:$0xff]
    %v142 = vpack.c.bf16 %v141, %v141
    %v143 = vld [vmem:[#allocation5] sm:$0xff]
    %v144 = vld [vmem:[#allocation5 + $0x8] sm:$0xff]
    %v145 = vld [vmem:[#allocation5 + $0x10] sm:$0xff]
    %v146 = vld [vmem:[#allocation5 + $0x18] sm:$0xff]
    %v147 = vld [vmem:[#allocation5 + $0x20] sm:$0xff]
    %v148 = vld [vmem:[#allocation5 + $0x28] sm:$0xff]
    %v149 = vld [vmem:[#allocation5 + $0x30] sm:$0xff]
    %v150 = vld [vmem:[#allocation5 + $0x38] sm:$0xff]
    %v151 = vld [vmem:[#allocation5 + $0x40] sm:$0xff]
    %v152 = vld [vmem:[#allocation5 + $0x48] sm:$0xff]
    %v153 = vld [vmem:[#allocation5 + $0x50] sm:$0xff]
    %v154 = vld [vmem:[#allocation5 + $0x58] sm:$0xff]
    %v155 = vld [vmem:[#allocation5 + $0x60] sm:$0xff]
    %v156 = vld [vmem:[#allocation5 + $0x68] sm:$0xff]
    %v157 = vld [vmem:[#allocation5 + $0x70] sm:$0xff]
    %v158 = vld [vmem:[#allocation5 + $0x78] sm:$0xff]
    %v159 = vld [vmem:[#allocation7] sm:$0xff]
    %v161 = vperm.slane %v159, 0
    %v162 = vperm.slane %v159, 1
    %v163 = vperm.slane %v159, 2
    %v164 = vperm.slane %v159, 3
    %v165 = vperm.slane %v159, 4
    %v166 = vperm.slane %v159, 5
    %v167 = vperm.slane %v159, 6
    %v168 = vperm.slane %v159, 7
    %v193 = vunpack.c.l.b16 %v143
    %v194 = vunpack.c.h.b16 %v143
    %v195 = vunpack.c.l.b16 %v144
    %v196 = vunpack.c.h.b16 %v144
    %v197 = vunpack.c.l.b16 %v145
    %v198 = vunpack.c.h.b16 %v145
    %v199 = vunpack.c.l.b16 %v146
    %v200 = vunpack.c.h.b16 %v146
    %v201 = vunpack.c.l.b16 %v147
    %v202 = vunpack.c.h.b16 %v147
    %v203 = vunpack.c.l.b16 %v148
    %v204 = vunpack.c.h.b16 %v148
    %v205 = vunpack.c.l.b16 %v149
    %v206 = vunpack.c.h.b16 %v149
    %v207 = vunpack.c.l.b16 %v150
    %v208 = vunpack.c.h.b16 %v150
    %v209 = vunpack.c.l.b16 %v151
    %v210 = vunpack.c.h.b16 %v151
    %v211 = vunpack.c.l.b16 %v152
    %v212 = vunpack.c.h.b16 %v152
    %v213 = vunpack.c.l.b16 %v153
    %v214 = vunpack.c.h.b16 %v153
    %v215 = vunpack.c.l.b16 %v154
    %v216 = vunpack.c.h.b16 %v154
    %v217 = vunpack.c.l.b16 %v155
    %v218 = vunpack.c.h.b16 %v155
    %v219 = vunpack.c.l.b16 %v156
    %v220 = vunpack.c.h.b16 %v156
    %v221 = vunpack.c.l.b16 %v157
    %v222 = vunpack.c.h.b16 %v157
    %v223 = vunpack.c.l.b16 %v158
    %v224 = vunpack.c.h.b16 %v158
    %v225 = vpack.c.b16 %v201, %v193
    %v226 = vpack.c.b16 %v202, %v194
    %v227 = vpack.c.b16 %v203, %v195
    %v228 = vpack.c.b16 %v204, %v196
    %v229 = vpack.c.b16 %v205, %v197
    %v230 = vpack.c.b16 %v206, %v198
    %v231 = vpack.c.b16 %v207, %v199
    %v232 = vpack.c.b16 %v208, %v200
    %v233 = vpack.c.b16 %v217, %v209
    %v234 = vpack.c.b16 %v218, %v210
    %v235 = vpack.c.b16 %v219, %v211
    %v236 = vpack.c.b16 %v220, %v212
    %v237 = vpack.c.b16 %v221, %v213
    %v238 = vpack.c.b16 %v222, %v214
    %v239 = vpack.c.b16 %v223, %v215
    %v240 = vpack.c.b16 %v224, %v216
    %vm257 = vcmask 261120
    %v259 = vsel %vm257, %v142, 0
    %261 = vmatpush.bf16.msra.mxu0 0
    %262 = vmatpush.bf16.msra.mxu0 0
    %263 = vmatpush.bf16.msra.mxu0 0
    %264 = vmatpush.bf16.msra.mxu0 0
    %265 = vmatpush.bf16.msra.mxu0 0
    %266 = vmatpush.bf16.msra.mxu0 0
    %267 = vmatpush.bf16.msra.mxu0 %v233
    %268 = vmatpush.bf16.msra.mxu0 %v225
    %269 = vmatmul.bf16.gmra.mxu0 %v259
    %v270 = vpop.f32.mrf.mxu0
    %v271 = vadd.f32 %v161, %v270
    %v272 = vpop.f32.mrf.mxu0
    %273 = vdwg.mxu0
    %274 = vmatpush.bf16.msra.mxu0 0
    %275 = vmatpush.bf16.msra.mxu0 0
    %276 = vmatpush.bf16.msra.mxu0 0
    %277 = vmatpush.bf16.msra.mxu0 0
    %278 = vmatpush.bf16.msra.mxu0 0
    %279 = vmatpush.bf16.msra.mxu0 0
    %280 = vmatpush.bf16.msra.mxu0 %v234
    %281 = vmatpush.bf16.msra.mxu0 %v226
    %282 = vmatmul.bf16.gmra.mxu0 %v259
    %v283 = vpop.f32.mrf.mxu0
    %v284 = vadd.f32 %v162, %v283
    %v285 = vpop.f32.mrf.mxu0
    %286 = vdwg.mxu0
    %287 = vmatpush.bf16.msra.mxu0 0
    %288 = vmatpush.bf16.msra.mxu0 0
    %289 = vmatpush.bf16.msra.mxu0 0
    %290 = vmatpush.bf16.msra.mxu0 0
    %291 = vmatpush.bf16.msra.mxu0 0
    %292 = vmatpush.bf16.msra.mxu0 0
    %293 = vmatpush.bf16.msra.mxu0 %v235
    %294 = vmatpush.bf16.msra.mxu0 %v227
    %295 = vmatmul.bf16.gmra.mxu0 %v259
    %v296 = vpop.f32.mrf.mxu0
    %v297 = vadd.f32 %v163, %v296
    %v298 = vpop.f32.mrf.mxu0
    %299 = vdwg.mxu0
    %300 = vmatpush.bf16.msra.mxu0 0
    %301 = vmatpush.bf16.msra.mxu0 0
    %302 = vmatpush.bf16.msra.mxu0 0
    %303 = vmatpush.bf16.msra.mxu0 0
    %304 = vmatpush.bf16.msra.mxu0 0
    %305 = vmatpush.bf16.msra.mxu0 0
    %306 = vmatpush.bf16.msra.mxu0 %v236
    %307 = vmatpush.bf16.msra.mxu0 %v228
    %308 = vmatmul.bf16.gmra.mxu0 %v259
    %v309 = vpop.f32.mrf.mxu0
    %v310 = vadd.f32 %v164, %v309
    %v311 = vpop.f32.mrf.mxu0
    %312 = vdwg.mxu0
    %313 = vmatpush.bf16.msra.mxu0 0
    %314 = vmatpush.bf16.msra.mxu0 0
    %315 = vmatpush.bf16.msra.mxu0 0
    %316 = vmatpush.bf16.msra.mxu0 0
    %317 = vmatpush.bf16.msra.mxu0 0
    %318 = vmatpush.bf16.msra.mxu0 0
    %319 = vmatpush.bf16.msra.mxu0 %v237
    %320 = vmatpush.bf16.msra.mxu0 %v229
    %321 = vmatmul.bf16.gmra.mxu0 %v259
    %v322 = vpop.f32.mrf.mxu0
    %v323 = vadd.f32 %v165, %v322
    %v324 = vpop.f32.mrf.mxu0
    %325 = vdwg.mxu0
    %326 = vmatpush.bf16.msra.mxu0 0
    %327 = vmatpush.bf16.msra.mxu0 0
    %328 = vmatpush.bf16.msra.mxu0 0
    %329 = vmatpush.bf16.msra.mxu0 0
    %330 = vmatpush.bf16.msra.mxu0 0
    %331 = vmatpush.bf16.msra.mxu0 0
    %332 = vmatpush.bf16.msra.mxu0 %v238
    %333 = vmatpush.bf16.msra.mxu0 %v230
    %334 = vmatmul.bf16.gmra.mxu0 %v259
    %v335 = vpop.f32.mrf.mxu0
    %v336 = vadd.f32 %v166, %v335
    %v337 = vpop.f32.mrf.mxu0
    %338 = vdwg.mxu0
    %339 = vmatpush.bf16.msra.mxu0 0
    %340 = vmatpush.bf16.msra.mxu0 0
    %341 = vmatpush.bf16.msra.mxu0 0
    %342 = vmatpush.bf16.msra.mxu0 0
    %343 = vmatpush.bf16.msra.mxu0 0
    %344 = vmatpush.bf16.msra.mxu0 0
    %345 = vmatpush.bf16.msra.mxu0 %v239
    %346 = vmatpush.bf16.msra.mxu0 %v231
    %347 = vmatmul.bf16.gmra.mxu0 %v259
    %v348 = vpop.f32.mrf.mxu0
    %v349 = vadd.f32 %v167, %v348
    %v350 = vpop.f32.mrf.mxu0
    %351 = vdwg.mxu0
    %352 = vmatpush.bf16.msra.mxu0 0
    %353 = vmatpush.bf16.msra.mxu0 0
    %354 = vmatpush.bf16.msra.mxu0 0
    %355 = vmatpush.bf16.msra.mxu0 0
    %356 = vmatpush.bf16.msra.mxu0 0
    %357 = vmatpush.bf16.msra.mxu0 0
    %358 = vmatpush.bf16.msra.mxu0 %v240
    %359 = vmatpush.bf16.msra.mxu0 %v232
    %360 = vmatmul.bf16.gmra.mxu0 %v259
    %v361 = vpop.f32.mrf.mxu0
    %v362 = vadd.f32 %v168, %v361
    %v363 = vpop.f32.mrf.mxu0
    %364 = vdwg.mxu0
    %v365 = vpack.c.bf16 %v284, %v271
    %v366 = vpack.c.bf16 %v310, %v297
    %v367 = vpack.c.bf16 %v336, %v323
    %v368 = vpack.c.bf16 %v362, %v349
    %v369 = vxor.u32 %v365, 2147516416
    %v370 = vxor.u32 %v366, 2147516416
    %v371 = vxor.u32 %v367, 2147516416
    %v372 = vxor.u32 %v368, 2147516416
    %v373 = vunpack.c.l.bf16 %v369
    %v374 = vunpack.c.h.bf16 %v369
    %v375 = vunpack.c.l.bf16 %v370
    %v376 = vunpack.c.h.bf16 %v370
    %v377 = vunpack.c.l.bf16 %v371
    %v378 = vunpack.c.h.bf16 %v371
    %v379 = vunpack.c.l.bf16 %v372
    %v380 = vunpack.c.h.bf16 %v372
    %v381 = vmul.f32 %v373, 1.442695
    %v382 = vpow.pop %v381
    %v383 = vmul.f32 %v374, 1.442695
    %v384 = vpow.pop %v383
    %v385 = vmul.f32 %v375, 1.442695
    %v386 = vpow.pop %v385
    %v387 = vmul.f32 %v376, 1.442695
    %v388 = vpow.pop %v387
    %v389 = vmul.f32 %v377, 1.442695
    %v390 = vpow.pop %v389
    %v391 = vmul.f32 %v378, 1.442695
    %v392 = vpow.pop %v391
    %v393 = vmul.f32 %v379, 1.442695
    %v394 = vpow.pop %v393
    %v395 = vmul.f32 %v380, 1.442695
    %v396 = vpow.pop %v395
    %v397 = vpack.c.bf16 %v384, %v382
    %v398 = vpack.c.bf16 %v388, %v386
    %v399 = vpack.c.bf16 %v392, %v390
    %v400 = vpack.c.bf16 %v396, %v394
    %v401 = vunpack.c.l.bf16 %v397
    %v402 = vunpack.c.h.bf16 %v397
    %v403 = vunpack.c.l.bf16 %v398
    %v404 = vunpack.c.h.bf16 %v398
    %v405 = vunpack.c.l.bf16 %v399
    %v406 = vunpack.c.h.bf16 %v399
    %v407 = vunpack.c.l.bf16 %v400
    %v408 = vunpack.c.h.bf16 %v400
    %v409 = vadd.f32 %v401, 1.0
    %v410 = vadd.f32 %v402, 1.0
    %v411 = vadd.f32 %v403, 1.0
    %v412 = vadd.f32 %v404, 1.0
    %v413 = vadd.f32 %v405, 1.0
    %v414 = vadd.f32 %v406, 1.0
    %v415 = vadd.f32 %v407, 1.0
    %v416 = vadd.f32 %v408, 1.0
    %v417 = vpack.c.bf16 %v410, %v409
    %v418 = vpack.c.bf16 %v412, %v411
    %v419 = vpack.c.bf16 %v414, %v413
    %v420 = vpack.c.bf16 %v416, %v415
    %v421 = vunpack.c.h.bf16 1065369472
    %v422 = vunpack.c.l.bf16 1065369472
    %v423 = vunpack.c.h.bf16 %v417
    %v424 = vunpack.c.l.bf16 %v417
    %v425 = vrcp.pop %v423
    %v426 = vmul.f32 %v421, %v425
    %v427 = vrcp.pop %v424
    %v428 = vmul.f32 %v422, %v427
    %v429 = vpack.c.bf16 %v426, %v428
    %v430 = vunpack.c.h.bf16 %v418
    %v431 = vunpack.c.l.bf16 %v418
    %v432 = vrcp.pop %v430
    %v433 = vmul.f32 %v421, %v432
    %v434 = vrcp.pop %v431
    %v435 = vmul.f32 %v422, %v434
    %v436 = vpack.c.bf16 %v433, %v435
    %v437 = vunpack.c.h.bf16 %v419
    %v438 = vunpack.c.l.bf16 %v419
    %v439 = vrcp.pop %v437
    %v440 = vmul.f32 %v421, %v439
    %v441 = vrcp.pop %v438
    %v442 = vmul.f32 %v422, %v441
    %v443 = vpack.c.bf16 %v440, %v442
    %v444 = vunpack.c.h.bf16 %v420
    %v445 = vunpack.c.l.bf16 %v420
    %v446 = vrcp.pop %v444
    %v447 = vmul.f32 %v421, %v446
    %v448 = vrcp.pop %v445
    %v449 = vmul.f32 %v422, %v448
    %v450 = vpack.c.bf16 %v447, %v449
    %v451 = vld [vmem:[#allocation8] sm:$0xff]
    %v452 = vld [vmem:[#allocation8 + $0x8] sm:$0xff]
    %v453 = vld [vmem:[#allocation8 + $0x10] sm:$0xff]
    %v454 = vld [vmem:[#allocation8 + $0x18] sm:$0xff]
    %v455 = vld [vmem:[#allocation8 + $0x20] sm:$0xff]
    %v456 = vld [vmem:[#allocation8 + $0x28] sm:$0xff]
    %v457 = vld [vmem:[#allocation8 + $0x30] sm:$0xff]
    %v458 = vld [vmem:[#allocation8 + $0x38] sm:$0xff]
    %v459 = vld [vmem:[#allocation8 + $0x40] sm:$0xff]
    %v460 = vld [vmem:[#allocation8 + $0x48] sm:$0xff]
    %v461 = vld [vmem:[#allocation8 + $0x50] sm:$0xff]
    %v462 = vld [vmem:[#allocation8 + $0x58] sm:$0xff]
    %v463 = vld [vmem:[#allocation8 + $0x60] sm:$0xff]
    %v464 = vld [vmem:[#allocation8 + $0x68] sm:$0xff]
    %v465 = vld [vmem:[#allocation8 + $0x70] sm:$0xff]
    %v466 = vld [vmem:[#allocation8 + $0x78] sm:$0xff]
    %v467 = vld [vmem:[#allocation8 + $0x80] sm:$0xff]
    %v468 = vld [vmem:[#allocation8 + $0x88] sm:$0xff]
    %v469 = vld [vmem:[#allocation8 + $0x90] sm:$0xff]
    %v470 = vld [vmem:[#allocation8 + $0x98] sm:$0xff]
    %v471 = vld [vmem:[#allocation8 + $0xa0] sm:$0xff]
    %v472 = vld [vmem:[#allocation8 + $0xa8] sm:$0xff]
    %v473 = vld [vmem:[#allocation8 + $0xb0] sm:$0xff]
    %v474 = vld [vmem:[#allocation8 + $0xb8] sm:$0xff]
    %v475 = vld [vmem:[#allocation8 + $0xc0] sm:$0xff]
    %v476 = vld [vmem:[#allocation8 + $0xc8] sm:$0xff]
    %v477 = vld [vmem:[#allocation8 + $0xd0] sm:$0xff]
    %v478 = vld [vmem:[#allocation8 + $0xd8] sm:$0xff]
    %v479 = vld [vmem:[#allocation8 + $0xe0] sm:$0xff]
    %v480 = vld [vmem:[#allocation8 + $0xe8] sm:$0xff]
    %v481 = vld [vmem:[#allocation8 + $0xf0] sm:$0xff]
    %v482 = vld [vmem:[#allocation8 + $0xf8] sm:$0xff]
    %v483 = vld [vmem:[#allocation8 + $0x100] sm:$0xff]
    %v484 = vld [vmem:[#allocation8 + $0x108] sm:$0xff]
    %v485 = vld [vmem:[#allocation8 + $0x110] sm:$0xff]
    %v486 = vld [vmem:[#allocation8 + $0x118] sm:$0xff]
    %v487 = vld [vmem:[#allocation8 + $0x120] sm:$0xff]
    %v488 = vld [vmem:[#allocation8 + $0x128] sm:$0xff]
    %v489 = vld [vmem:[#allocation8 + $0x130] sm:$0xff]
    %v490 = vld [vmem:[#allocation8 + $0x138] sm:$0xff]
    %v491 = vld [vmem:[#allocation8 + $0x140] sm:$0xff]
    %v492 = vld [vmem:[#allocation8 + $0x148] sm:$0xff]
    %v493 = vld [vmem:[#allocation8 + $0x150] sm:$0xff]
    %v494 = vld [vmem:[#allocation8 + $0x158] sm:$0xff]
    %v495 = vld [vmem:[#allocation8 + $0x160] sm:$0xff]
    %v496 = vld [vmem:[#allocation8 + $0x168] sm:$0xff]
    %v497 = vld [vmem:[#allocation8 + $0x170] sm:$0xff]
    %v498 = vld [vmem:[#allocation8 + $0x178] sm:$0xff]
    %v499 = vld [vmem:[#allocation8 + $0x180] sm:$0xff]
    %v500 = vld [vmem:[#allocation8 + $0x188] sm:$0xff]
    %v501 = vld [vmem:[#allocation8 + $0x190] sm:$0xff]
    %v502 = vld [vmem:[#allocation8 + $0x198] sm:$0xff]
    %v503 = vld [vmem:[#allocation8 + $0x1a0] sm:$0xff]
    %v504 = vld [vmem:[#allocation8 + $0x1a8] sm:$0xff]
    %v505 = vld [vmem:[#allocation8 + $0x1b0] sm:$0xff]
    %v506 = vld [vmem:[#allocation8 + $0x1b8] sm:$0xff]
    %v507 = vld [vmem:[#allocation8 + $0x1c0] sm:$0xff]
    %v508 = vld [vmem:[#allocation8 + $0x1c8] sm:$0xff]
    %v509 = vld [vmem:[#allocation8 + $0x1d0] sm:$0xff]
    %v510 = vld [vmem:[#allocation8 + $0x1d8] sm:$0xff]
    %v511 = vld [vmem:[#allocation8 + $0x1e0] sm:$0xff]
    %v512 = vld [vmem:[#allocation8 + $0x1e8] sm:$0xff]
    %v513 = vld [vmem:[#allocation8 + $0x1f0] sm:$0xff]
    %v514 = vld [vmem:[#allocation8 + $0x1f8] sm:$0xff]
    %v515 = vld [vmem:[#allocation8 + $0x200] sm:$0xff]
    %v516 = vld [vmem:[#allocation8 + $0x208] sm:$0xff]
    %v517 = vld [vmem:[#allocation8 + $0x210] sm:$0xff]
    %v518 = vld [vmem:[#allocation8 + $0x218] sm:$0xff]
    %v519 = vld [vmem:[#allocation8 + $0x220] sm:$0xff]
    %v520 = vld [vmem:[#allocation8 + $0x228] sm:$0xff]
    %v521 = vld [vmem:[#allocation8 + $0x230] sm:$0xff]
    %v522 = vld [vmem:[#allocation8 + $0x238] sm:$0xff]
    %v523 = vld [vmem:[#allocation8 + $0x240] sm:$0xff]
    %v524 = vld [vmem:[#allocation8 + $0x248] sm:$0xff]
    %v525 = vld [vmem:[#allocation8 + $0x250] sm:$0xff]
    %v526 = vld [vmem:[#allocation8 + $0x258] sm:$0xff]
    %v527 = vld [vmem:[#allocation8 + $0x260] sm:$0xff]
    %v528 = vld [vmem:[#allocation8 + $0x268] sm:$0xff]
    %v529 = vld [vmem:[#allocation8 + $0x270] sm:$0xff]
    %v530 = vld [vmem:[#allocation8 + $0x278] sm:$0xff]
    %v531 = vld [vmem:[#allocation8 + $0x280] sm:$0xff]
    %v532 = vld [vmem:[#allocation8 + $0x288] sm:$0xff]
    %v533 = vld [vmem:[#allocation8 + $0x290] sm:$0xff]
    %v534 = vld [vmem:[#allocation8 + $0x298] sm:$0xff]
    %v535 = vld [vmem:[#allocation8 + $0x2a0] sm:$0xff]
    %v536 = vld [vmem:[#allocation8 + $0x2a8] sm:$0xff]
    %v537 = vld [vmem:[#allocation8 + $0x2b0] sm:$0xff]
    %v538 = vld [vmem:[#allocation8 + $0x2b8] sm:$0xff]
    %v539 = vld [vmem:[#allocation8 + $0x2c0] sm:$0xff]
    %v540 = vld [vmem:[#allocation8 + $0x2c8] sm:$0xff]
    %v541 = vld [vmem:[#allocation8 + $0x2d0] sm:$0xff]
    %v542 = vld [vmem:[#allocation8 + $0x2d8] sm:$0xff]
    %v543 = vld [vmem:[#allocation8 + $0x2e0] sm:$0xff]
    %v544 = vld [vmem:[#allocation8 + $0x2e8] sm:$0xff]
    %v545 = vld [vmem:[#allocation8 + $0x2f0] sm:$0xff]
    %v546 = vld [vmem:[#allocation8 + $0x2f8] sm:$0xff]
    %v547 = vld [vmem:[#allocation8 + $0x300] sm:$0xff]
    %v548 = vld [vmem:[#allocation8 + $0x308] sm:$0xff]
    %v549 = vld [vmem:[#allocation8 + $0x310] sm:$0xff]
    %v550 = vld [vmem:[#allocation8 + $0x318] sm:$0xff]
    %v551 = vld [vmem:[#allocation8 + $0x320] sm:$0xff]
    %v552 = vld [vmem:[#allocation8 + $0x328] sm:$0xff]
    %v553 = vld [vmem:[#allocation8 + $0x330] sm:$0xff]
    %v554 = vld [vmem:[#allocation8 + $0x338] sm:$0xff]
    %v555 = vld [vmem:[#allocation8 + $0x340] sm:$0xff]
    %v556 = vld [vmem:[#allocation8 + $0x348] sm:$0xff]
    %v557 = vld [vmem:[#allocation8 + $0x350] sm:$0xff]
    %v558 = vld [vmem:[#allocation8 + $0x358] sm:$0xff]
    %v559 = vld [vmem:[#allocation8 + $0x360] sm:$0xff]
    %v560 = vld [vmem:[#allocation8 + $0x368] sm:$0xff]
    %v561 = vld [vmem:[#allocation8 + $0x370] sm:$0xff]
    %v562 = vld [vmem:[#allocation8 + $0x378] sm:$0xff]
    %v563 = vld [vmem:[#allocation8 + $0x380] sm:$0xff]
    %v564 = vld [vmem:[#allocation8 + $0x388] sm:$0xff]
    %v565 = vld [vmem:[#allocation8 + $0x390] sm:$0xff]
    %v566 = vld [vmem:[#allocation8 + $0x398] sm:$0xff]
    %v567 = vld [vmem:[#allocation8 + $0x3a0] sm:$0xff]
    %v568 = vld [vmem:[#allocation8 + $0x3a8] sm:$0xff]
    %v569 = vld [vmem:[#allocation8 + $0x3b0] sm:$0xff]
    %v570 = vld [vmem:[#allocation8 + $0x3b8] sm:$0xff]
    %v571 = vld [vmem:[#allocation8 + $0x3c0] sm:$0xff]
    %v572 = vld [vmem:[#allocation8 + $0x3c8] sm:$0xff]
    %v573 = vld [vmem:[#allocation8 + $0x3d0] sm:$0xff]
    %v574 = vld [vmem:[#allocation8 + $0x3d8] sm:$0xff]
    %v575 = vld [vmem:[#allocation8 + $0x3e0] sm:$0xff]
    %v576 = vld [vmem:[#allocation8 + $0x3e8] sm:$0xff]
    %v577 = vld [vmem:[#allocation8 + $0x3f0] sm:$0xff]
    %v578 = vld [vmem:[#allocation8 + $0x3f8] sm:$0xff]
    %v579 = vld [vmem:[#allocation10] sm:$0xf]
    %v581 = vperm.slane %v579, 0
    %v582 = vperm.slane %v579, 1
    %v583 = vperm.slane %v579, 2
    %v584 = vperm.slane %v579, 3
    %v591 = vunpack.c.l.b16 %v429
    %v592 = vunpack.c.h.b16 %v429
    %v593 = vunpack.c.l.b16 %v436
    %v594 = vunpack.c.h.b16 %v436
    %v595 = vpack.c.b16 %v591, %v591
    %v596 = vpack.c.b16 %v592, %v592
    %v597 = vpack.c.b16 %v593, %v593
    %v598 = vpack.c.b16 %v594, %v594
    %v731 = vunpack.c.l.b16 %v451
    %v732 = vunpack.c.h.b16 %v451
    %v733 = vunpack.c.l.b16 %v452
    %v734 = vunpack.c.h.b16 %v452
    %v735 = vunpack.c.l.b16 %v453
    %v736 = vunpack.c.h.b16 %v453
    %v737 = vunpack.c.l.b16 %v454
    %v738 = vunpack.c.h.b16 %v454
    %v739 = vunpack.c.l.b16 %v455
    %v740 = vunpack.c.h.b16 %v455
    %v741 = vunpack.c.l.b16 %v456
    %v742 = vunpack.c.h.b16 %v456
    %v743 = vunpack.c.l.b16 %v457
    %v744 = vunpack.c.h.b16 %v457
    %v745 = vunpack.c.l.b16 %v458
    %v746 = vunpack.c.h.b16 %v458
    %v747 = vunpack.c.l.b16 %v459
    %v748 = vunpack.c.h.b16 %v459
    %v749 = vunpack.c.l.b16 %v460
    %v750 = vunpack.c.h.b16 %v460
    %v751 = vunpack.c.l.b16 %v461
    %v752 = vunpack.c.h.b16 %v461
    %v753 = vunpack.c.l.b16 %v462
    %v754 = vunpack.c.h.b16 %v462
    %v755 = vunpack.c.l.b16 %v463
    %v756 = vunpack.c.h.b16 %v463
    %v757 = vunpack.c.l.b16 %v464
    %v758 = vunpack.c.h.b16 %v464
    %v759 = vunpack.c.l.b16 %v465
    %v760 = vunpack.c.h.b16 %v465
    %v761 = vunpack.c.l.b16 %v466
    %v762 = vunpack.c.h.b16 %v466
    %v763 = vunpack.c.l.b16 %v467
    %v764 = vunpack.c.h.b16 %v467
    %v765 = vunpack.c.l.b16 %v468
    %v766 = vunpack.c.h.b16 %v468
    %v767 = vunpack.c.l.b16 %v469
    %v768 = vunpack.c.h.b16 %v469
    %v769 = vunpack.c.l.b16 %v470
    %v770 = vunpack.c.h.b16 %v470
    %v771 = vunpack.c.l.b16 %v471
    %v772 = vunpack.c.h.b16 %v471
    %v773 = vunpack.c.l.b16 %v472
    %v774 = vunpack.c.h.b16 %v472
    %v775 = vunpack.c.l.b16 %v473
    %v776 = vunpack.c.h.b16 %v473
    %v777 = vunpack.c.l.b16 %v474
    %v778 = vunpack.c.h.b16 %v474
    %v779 = vunpack.c.l.b16 %v475
    %v780 = vunpack.c.h.b16 %v475
    %v781 = vunpack.c.l.b16 %v476
    %v782 = vunpack.c.h.b16 %v476
    %v783 = vunpack.c.l.b16 %v477
    %v784 = vunpack.c.h.b16 %v477
    %v785 = vunpack.c.l.b16 %v478
    %v786 = vunpack.c.h.b16 %v478
    %v787 = vunpack.c.l.b16 %v479
    %v788 = vunpack.c.h.b16 %v479
    %v789 = vunpack.c.l.b16 %v480
    %v790 = vunpack.c.h.b16 %v480
    %v791 = vunpack.c.l.b16 %v481
    %v792 = vunpack.c.h.b16 %v481
    %v793 = vunpack.c.l.b16 %v482
    %v794 = vunpack.c.h.b16 %v482
    %v795 = vunpack.c.l.b16 %v483
    %v796 = vunpack.c.h.b16 %v483
    %v797 = vunpack.c.l.b16 %v484
    %v798 = vunpack.c.h.b16 %v484
    %v799 = vunpack.c.l.b16 %v485
    %v800 = vunpack.c.h.b16 %v485
    %v801 = vunpack.c.l.b16 %v486
    %v802 = vunpack.c.h.b16 %v486
    %v803 = vunpack.c.l.b16 %v487
    %v804 = vunpack.c.h.b16 %v487
    %v805 = vunpack.c.l.b16 %v488
    %v806 = vunpack.c.h.b16 %v488
    %v807 = vunpack.c.l.b16 %v489
    %v808 = vunpack.c.h.b16 %v489
    %v809 = vunpack.c.l.b16 %v490
    %v810 = vunpack.c.h.b16 %v490
    %v811 = vunpack.c.l.b16 %v491
    %v812 = vunpack.c.h.b16 %v491
    %v813 = vunpack.c.l.b16 %v492
    %v814 = vunpack.c.h.b16 %v492
    %v815 = vunpack.c.l.b16 %v493
    %v816 = vunpack.c.h.b16 %v493
    %v817 = vunpack.c.l.b16 %v494
    %v818 = vunpack.c.h.b16 %v494
    %v819 = vunpack.c.l.b16 %v495
    %v820 = vunpack.c.h.b16 %v495
    %v821 = vunpack.c.l.b16 %v496
    %v822 = vunpack.c.h.b16 %v496
    %v823 = vunpack.c.l.b16 %v497
    %v824 = vunpack.c.h.b16 %v497
    %v825 = vunpack.c.l.b16 %v498
    %v826 = vunpack.c.h.b16 %v498
    %v827 = vunpack.c.l.b16 %v499
    %v828 = vunpack.c.h.b16 %v499
    %v829 = vunpack.c.l.b16 %v500
    %v830 = vunpack.c.h.b16 %v500
    %v831 = vunpack.c.l.b16 %v501
    %v832 = vunpack.c.h.b16 %v501
    %v833 = vunpack.c.l.b16 %v502
    %v834 = vunpack.c.h.b16 %v502
    %v835 = vunpack.c.l.b16 %v503
    %v836 = vunpack.c.h.b16 %v503
    %v837 = vunpack.c.l.b16 %v504
    %v838 = vunpack.c.h.b16 %v504
    %v839 = vunpack.c.l.b16 %v505
    %v840 = vunpack.c.h.b16 %v505
    %v841 = vunpack.c.l.b16 %v506
    %v842 = vunpack.c.h.b16 %v506
    %v843 = vunpack.c.l.b16 %v507
    %v844 = vunpack.c.h.b16 %v507
    %v845 = vunpack.c.l.b16 %v508
    %v846 = vunpack.c.h.b16 %v508
    %v847 = vunpack.c.l.b16 %v509
    %v848 = vunpack.c.h.b16 %v509
    %v849 = vunpack.c.l.b16 %v510
    %v850 = vunpack.c.h.b16 %v510
    %v851 = vunpack.c.l.b16 %v511
    %v852 = vunpack.c.h.b16 %v511
    %v853 = vunpack.c.l.b16 %v512
    %v854 = vunpack.c.h.b16 %v512
    %v855 = vunpack.c.l.b16 %v513
    %v856 = vunpack.c.h.b16 %v513
    %v857 = vunpack.c.l.b16 %v514
    %v858 = vunpack.c.h.b16 %v514
    %v859 = vunpack.c.l.b16 %v515
    %v860 = vunpack.c.h.b16 %v515
    %v861 = vunpack.c.l.b16 %v516
    %v862 = vunpack.c.h.b16 %v516
    %v863 = vunpack.c.l.b16 %v517
    %v864 = vunpack.c.h.b16 %v517
    %v865 = vunpack.c.l.b16 %v518
    %v866 = vunpack.c.h.b16 %v518
    %v867 = vunpack.c.l.b16 %v519
    %v868 = vunpack.c.h.b16 %v519
    %v869 = vunpack.c.l.b16 %v520
    %v870 = vunpack.c.h.b16 %v520
    %v871 = vunpack.c.l.b16 %v521
    %v872 = vunpack.c.h.b16 %v521
    %v873 = vunpack.c.l.b16 %v522
    %v874 = vunpack.c.h.b16 %v522
    %v875 = vunpack.c.l.b16 %v523
    %v876 = vunpack.c.h.b16 %v523
    %v877 = vunpack.c.l.b16 %v524
    %v878 = vunpack.c.h.b16 %v524
    %v879 = vunpack.c.l.b16 %v525
    %v880 = vunpack.c.h.b16 %v525
    %v881 = vunpack.c.l.b16 %v526
    %v882 = vunpack.c.h.b16 %v526
    %v883 = vunpack.c.l.b16 %v527
    %v884 = vunpack.c.h.b16 %v527
    %v885 = vunpack.c.l.b16 %v528
    %v886 = vunpack.c.h.b16 %v528
    %v887 = vunpack.c.l.b16 %v529
    %v888 = vunpack.c.h.b16 %v529
    %v889 = vunpack.c.l.b16 %v530
    %v890 = vunpack.c.h.b16 %v530
    %v891 = vunpack.c.l.b16 %v531
    %v892 = vunpack.c.h.b16 %v531
    %v893 = vunpack.c.l.b16 %v532
    %v894 = vunpack.c.h.b16 %v532
    %v895 = vunpack.c.l.b16 %v533
    %v896 = vunpack.c.h.b16 %v533
    %v897 = vunpack.c.l.b16 %v534
    %v898 = vunpack.c.h.b16 %v534
    %v899 = vunpack.c.l.b16 %v535
    %v900 = vunpack.c.h.b16 %v535
    %v901 = vunpack.c.l.b16 %v536
    %v902 = vunpack.c.h.b16 %v536
    %v903 = vunpack.c.l.b16 %v537
    %v904 = vunpack.c.h.b16 %v537
    %v905 = vunpack.c.l.b16 %v538
    %v906 = vunpack.c.h.b16 %v538
    %v907 = vunpack.c.l.b16 %v539
    %v908 = vunpack.c.h.b16 %v539
    %v909 = vunpack.c.l.b16 %v540
    %v910 = vunpack.c.h.b16 %v540
    %v911 = vunpack.c.l.b16 %v541
    %v912 = vunpack.c.h.b16 %v541
    %v913 = vunpack.c.l.b16 %v542
    %v914 = vunpack.c.h.b16 %v542
    %v915 = vunpack.c.l.b16 %v543
    %v916 = vunpack.c.h.b16 %v543
    %v917 = vunpack.c.l.b16 %v544
    %v918 = vunpack.c.h.b16 %v544
    %v919 = vunpack.c.l.b16 %v545
    %v920 = vunpack.c.h.b16 %v545
    %v921 = vunpack.c.l.b16 %v546
    %v922 = vunpack.c.h.b16 %v546
    %v923 = vunpack.c.l.b16 %v547
    %v924 = vunpack.c.h.b16 %v547
    %v925 = vunpack.c.l.b16 %v548
    %v926 = vunpack.c.h.b16 %v548
    %v927 = vunpack.c.l.b16 %v549
    %v928 = vunpack.c.h.b16 %v549
    %v929 = vunpack.c.l.b16 %v550
    %v930 = vunpack.c.h.b16 %v550
    %v931 = vunpack.c.l.b16 %v551
    %v932 = vunpack.c.h.b16 %v551
    %v933 = vunpack.c.l.b16 %v552
    %v934 = vunpack.c.h.b16 %v552
    %v935 = vunpack.c.l.b16 %v553
    %v936 = vunpack.c.h.b16 %v553
    %v937 = vunpack.c.l.b16 %v554
    %v938 = vunpack.c.h.b16 %v554
    %v939 = vunpack.c.l.b16 %v555
    %v940 = vunpack.c.h.b16 %v555
    %v941 = vunpack.c.l.b16 %v556
    %v942 = vunpack.c.h.b16 %v556
    %v943 = vunpack.c.l.b16 %v557
    %v944 = vunpack.c.h.b16 %v557
    %v945 = vunpack.c.l.b16 %v558
    %v946 = vunpack.c.h.b16 %v558
    %v947 = vunpack.c.l.b16 %v559
    %v948 = vunpack.c.h.b16 %v559
    %v949 = vunpack.c.l.b16 %v560
    %v950 = vunpack.c.h.b16 %v560
    %v951 = vunpack.c.l.b16 %v561
    %v952 = vunpack.c.h.b16 %v561
    %v953 = vunpack.c.l.b16 %v562
    %v954 = vunpack.c.h.b16 %v562
    %v955 = vunpack.c.l.b16 %v563
    %v956 = vunpack.c.h.b16 %v563
    %v957 = vunpack.c.l.b16 %v564
    %v958 = vunpack.c.h.b16 %v564
    %v959 = vunpack.c.l.b16 %v565
    %v960 = vunpack.c.h.b16 %v565
    %v961 = vunpack.c.l.b16 %v566
    %v962 = vunpack.c.h.b16 %v566
    %v963 = vunpack.c.l.b16 %v567
    %v964 = vunpack.c.h.b16 %v567
    %v965 = vunpack.c.l.b16 %v568
    %v966 = vunpack.c.h.b16 %v568
    %v967 = vunpack.c.l.b16 %v569
    %v968 = vunpack.c.h.b16 %v569
    %v969 = vunpack.c.l.b16 %v570
    %v970 = vunpack.c.h.b16 %v570
    %v971 = vunpack.c.l.b16 %v571
    %v972 = vunpack.c.h.b16 %v571
    %v973 = vunpack.c.l.b16 %v572
    %v974 = vunpack.c.h.b16 %v572
    %v975 = vunpack.c.l.b16 %v573
    %v976 = vunpack.c.h.b16 %v573
    %v977 = vunpack.c.l.b16 %v574
    %v978 = vunpack.c.h.b16 %v574
    %v979 = vunpack.c.l.b16 %v575
    %v980 = vunpack.c.h.b16 %v575
    %v981 = vunpack.c.l.b16 %v576
    %v982 = vunpack.c.h.b16 %v576
    %v983 = vunpack.c.l.b16 %v577
    %v984 = vunpack.c.h.b16 %v577
    %v985 = vunpack.c.l.b16 %v578
    %v986 = vunpack.c.h.b16 %v578
    %v987 = vpack.c.b16 %v735, %v731
    %v988 = vpack.c.b16 %v736, %v732
    %v989 = vpack.c.b16 %v737, %v733
    %v990 = vpack.c.b16 %v738, %v734
    %v991 = vpack.c.b16 %v743, %v739
    %v992 = vpack.c.b16 %v744, %v740
    %v993 = vpack.c.b16 %v745, %v741
    %v994 = vpack.c.b16 %v746, %v742
    %v995 = vpack.c.b16 %v751, %v747
    %v996 = vpack.c.b16 %v752, %v748
    %v997 = vpack.c.b16 %v753, %v749
    %v998 = vpack.c.b16 %v754, %v750
    %v999 = vpack.c.b16 %v759, %v755
    %v1000 = vpack.c.b16 %v760, %v756
    %v1001 = vpack.c.b16 %v761, %v757
    %v1002 = vpack.c.b16 %v762, %v758
    %v1003 = vpack.c.b16 %v767, %v763
    %v1004 = vpack.c.b16 %v768, %v764
    %v1005 = vpack.c.b16 %v769, %v765
    %v1006 = vpack.c.b16 %v770, %v766
    %v1007 = vpack.c.b16 %v775, %v771
    %v1008 = vpack.c.b16 %v776, %v772
    %v1009 = vpack.c.b16 %v777, %v773
    %v1010 = vpack.c.b16 %v778, %v774
    %v1011 = vpack.c.b16 %v783, %v779
    %v1012 = vpack.c.b16 %v784, %v780
    %v1013 = vpack.c.b16 %v785, %v781
    %v1014 = vpack.c.b16 %v786, %v782
    %v1015 = vpack.c.b16 %v791, %v787
    %v1016 = vpack.c.b16 %v792, %v788
    %v1017 = vpack.c.b16 %v793, %v789
    %v1018 = vpack.c.b16 %v794, %v790
    %v1019 = vpack.c.b16 %v799, %v795
    %v1020 = vpack.c.b16 %v800, %v796
    %v1021 = vpack.c.b16 %v801, %v797
    %v1022 = vpack.c.b16 %v802, %v798
    %v1023 = vpack.c.b16 %v807, %v803
    %v1024 = vpack.c.b16 %v808, %v804
    %v1025 = vpack.c.b16 %v809, %v805
    %v1026 = vpack.c.b16 %v810, %v806
    %v1027 = vpack.c.b16 %v815, %v811
    %v1028 = vpack.c.b16 %v816, %v812
    %v1029 = vpack.c.b16 %v817, %v813
    %v1030 = vpack.c.b16 %v818, %v814
    %v1031 = vpack.c.b16 %v823, %v819
    %v1032 = vpack.c.b16 %v824, %v820
    %v1033 = vpack.c.b16 %v825, %v821
    %v1034 = vpack.c.b16 %v826, %v822
    %v1035 = vpack.c.b16 %v831, %v827
    %v1036 = vpack.c.b16 %v832, %v828
    %v1037 = vpack.c.b16 %v833, %v829
    %v1038 = vpack.c.b16 %v834, %v830
    %v1039 = vpack.c.b16 %v839, %v835
    %v1040 = vpack.c.b16 %v840, %v836
    %v1041 = vpack.c.b16 %v841, %v837
    %v1042 = vpack.c.b16 %v842, %v838
    %v1043 = vpack.c.b16 %v847, %v843
    %v1044 = vpack.c.b16 %v848, %v844
    %v1045 = vpack.c.b16 %v849, %v845
    %v1046 = vpack.c.b16 %v850, %v846
    %v1047 = vpack.c.b16 %v855, %v851
    %v1048 = vpack.c.b16 %v856, %v852
    %v1049 = vpack.c.b16 %v857, %v853
    %v1050 = vpack.c.b16 %v858, %v854
    %v1051 = vpack.c.b16 %v863, %v859
    %v1052 = vpack.c.b16 %v864, %v860
    %v1053 = vpack.c.b16 %v865, %v861
    %v1054 = vpack.c.b16 %v866, %v862
    %v1055 = vpack.c.b16 %v871, %v867
    %v1056 = vpack.c.b16 %v872, %v868
    %v1057 = vpack.c.b16 %v873, %v869
    %v1058 = vpack.c.b16 %v874, %v870
    %v1059 = vpack.c.b16 %v879, %v875
    %v1060 = vpack.c.b16 %v880, %v876
    %v1061 = vpack.c.b16 %v881, %v877
    %v1062 = vpack.c.b16 %v882, %v878
    %v1063 = vpack.c.b16 %v887, %v883
    %v1064 = vpack.c.b16 %v888, %v884
    %v1065 = vpack.c.b16 %v889, %v885
    %v1066 = vpack.c.b16 %v890, %v886
    %v1067 = vpack.c.b16 %v895, %v891
    %v1068 = vpack.c.b16 %v896, %v892
    %v1069 = vpack.c.b16 %v897, %v893
    %v1070 = vpack.c.b16 %v898, %v894
    %v1071 = vpack.c.b16 %v903, %v899
    %v1072 = vpack.c.b16 %v904, %v900
    %v1073 = vpack.c.b16 %v905, %v901
    %v1074 = vpack.c.b16 %v906, %v902
    %v1075 = vpack.c.b16 %v911, %v907
    %v1076 = vpack.c.b16 %v912, %v908
    %v1077 = vpack.c.b16 %v913, %v909
    %v1078 = vpack.c.b16 %v914, %v910
    %v1079 = vpack.c.b16 %v919, %v915
    %v1080 = vpack.c.b16 %v920, %v916
    %v1081 = vpack.c.b16 %v921, %v917
    %v1082 = vpack.c.b16 %v922, %v918
    %v1083 = vpack.c.b16 %v927, %v923
    %v1084 = vpack.c.b16 %v928, %v924
    %v1085 = vpack.c.b16 %v929, %v925
    %v1086 = vpack.c.b16 %v930, %v926
    %v1087 = vpack.c.b16 %v935, %v931
    %v1088 = vpack.c.b16 %v936, %v932
    %v1089 = vpack.c.b16 %v937, %v933
    %v1090 = vpack.c.b16 %v938, %v934
    %v1091 = vpack.c.b16 %v943, %v939
    %v1092 = vpack.c.b16 %v944, %v940
    %v1093 = vpack.c.b16 %v945, %v941
    %v1094 = vpack.c.b16 %v946, %v942
    %v1095 = vpack.c.b16 %v951, %v947
    %v1096 = vpack.c.b16 %v952, %v948
    %v1097 = vpack.c.b16 %v953, %v949
    %v1098 = vpack.c.b16 %v954, %v950
    %v1099 = vpack.c.b16 %v959, %v955
    %v1100 = vpack.c.b16 %v960, %v956
    %v1101 = vpack.c.b16 %v961, %v957
    %v1102 = vpack.c.b16 %v962, %v958
    %v1103 = vpack.c.b16 %v967, %v963
    %v1104 = vpack.c.b16 %v968, %v964
    %v1105 = vpack.c.b16 %v969, %v965
    %v1106 = vpack.c.b16 %v970, %v966
    %v1107 = vpack.c.b16 %v975, %v971
    %v1108 = vpack.c.b16 %v976, %v972
    %v1109 = vpack.c.b16 %v977, %v973
    %v1110 = vpack.c.b16 %v978, %v974
    %v1111 = vpack.c.b16 %v983, %v979
    %v1112 = vpack.c.b16 %v984, %v980
    %v1113 = vpack.c.b16 %v985, %v981
    %v1114 = vpack.c.b16 %v986, %v982
    %1243 = vmatpush.bf16.msra.mxu0 %v1015
    %1244 = vmatpush.bf16.msra.mxu0 %v1011
    %1245 = vmatpush.bf16.msra.mxu0 %v1007
    %1246 = vmatpush.bf16.msra.mxu0 %v1003
    %1247 = vmatpush.bf16.msra.mxu0 %v999
    %1248 = vmatpush.bf16.msra.mxu0 %v995
    %1249 = vmatpush.bf16.msra.mxu0 %v991
    %1250 = vmatpush.bf16.msra.mxu0 %v987
    %1251 = vmatmul.bf16.gmra.mxu0 %v595
    %v1252 = vpop.f32.mrf.mxu0
    %v1253 = vadd.f32 %v581, %v1252
    %v1254 = vpop.f32.mrf.mxu0
    %1255 = vdwg.mxu0
    %1256 = vmatpush.bf16.msra.mxu0 %v1047
    %1257 = vmatpush.bf16.msra.mxu0 %v1043
    %1258 = vmatpush.bf16.msra.mxu0 %v1039
    %1259 = vmatpush.bf16.msra.mxu0 %v1035
    %1260 = vmatpush.bf16.msra.mxu0 %v1031
    %1261 = vmatpush.bf16.msra.mxu0 %v1027
    %1262 = vmatpush.bf16.msra.mxu0 %v1023
    %1263 = vmatpush.bf16.msra.mxu0 %v1019
    %1264 = vmatmul.bf16.gmra.mxu0 %v596
    %v1265 = vpop.f32.mrf.mxu0
    %v1266 = vadd.f32 %v1253, %v1265
    %v1267 = vpop.f32.mrf.mxu0
    %1268 = vdwg.mxu0
    %1269 = vmatpush.bf16.msra.mxu0 %v1079
    %1270 = vmatpush.bf16.msra.mxu0 %v1075
    %1271 = vmatpush.bf16.msra.mxu0 %v1071
    %1272 = vmatpush.bf16.msra.mxu0 %v1067
    %1273 = vmatpush.bf16.msra.mxu0 %v1063
    %1274 = vmatpush.bf16.msra.mxu0 %v1059
    %1275 = vmatpush.bf16.msra.mxu0 %v1055
    %1276 = vmatpush.bf16.msra.mxu0 %v1051
    %1277 = vmatmul.bf16.gmra.mxu0 %v597
    %v1278 = vpop.f32.mrf.mxu0
    %v1279 = vadd.f32 %v1266, %v1278
    %v1280 = vpop.f32.mrf.mxu0
    %1281 = vdwg.mxu0
    %1282 = vmatpush.bf16.msra.mxu0 %v1111
    %1283 = vmatpush.bf16.msra.mxu0 %v1107
    %1284 = vmatpush.bf16.msra.mxu0 %v1103
    %1285 = vmatpush.bf16.msra.mxu0 %v1099
    %1286 = vmatpush.bf16.msra.mxu0 %v1095
    %1287 = vmatpush.bf16.msra.mxu0 %v1091
    %1288 = vmatpush.bf16.msra.mxu0 %v1087
    %1289 = vmatpush.bf16.msra.mxu0 %v1083
    %1290 = vmatmul.bf16.gmra.mxu0 %v598
    %v1291 = vpop.f32.mrf.mxu0
    %v1292 = vadd.f32 %v1279, %v1291
    %v1293 = vpop.f32.mrf.mxu0
    %1294 = vdwg.mxu0
    %1295 = vmatpush.bf16.msra.mxu0 %v1016
    %1296 = vmatpush.bf16.msra.mxu0 %v1012
    %1297 = vmatpush.bf16.msra.mxu0 %v1008
    %1298 = vmatpush.bf16.msra.mxu0 %v1004
    %1299 = vmatpush.bf16.msra.mxu0 %v1000
    %1300 = vmatpush.bf16.msra.mxu0 %v996
    %1301 = vmatpush.bf16.msra.mxu0 %v992
    %1302 = vmatpush.bf16.msra.mxu0 %v988
    %1303 = vmatmul.bf16.gmra.mxu0 %v595
    %v1304 = vpop.f32.mrf.mxu0
    %v1305 = vadd.f32 %v582, %v1304
    %v1306 = vpop.f32.mrf.mxu0
    %1307 = vdwg.mxu0
    %1308 = vmatpush.bf16.msra.mxu0 %v1048
    %1309 = vmatpush.bf16.msra.mxu0 %v1044
    %1310 = vmatpush.bf16.msra.mxu0 %v1040
    %1311 = vmatpush.bf16.msra.mxu0 %v1036
    %1312 = vmatpush.bf16.msra.mxu0 %v1032
    %1313 = vmatpush.bf16.msra.mxu0 %v1028
    %1314 = vmatpush.bf16.msra.mxu0 %v1024
    %1315 = vmatpush.bf16.msra.mxu0 %v1020
    %1316 = vmatmul.bf16.gmra.mxu0 %v596
    %v1317 = vpop.f32.mrf.mxu0
    %v1318 = vadd.f32 %v1305, %v1317
    %v1319 = vpop.f32.mrf.mxu0
    %1320 = vdwg.mxu0
    %1321 = vmatpush.bf16.msra.mxu0 %v1080
    %1322 = vmatpush.bf16.msra.mxu0 %v1076
    %1323 = vmatpush.bf16.msra.mxu0 %v1072
    %1324 = vmatpush.bf16.msra.mxu0 %v1068
    %1325 = vmatpush.bf16.msra.mxu0 %v1064
    %1326 = vmatpush.bf16.msra.mxu0 %v1060
    %1327 = vmatpush.bf16.msra.mxu0 %v1056
    %1328 = vmatpush.bf16.msra.mxu0 %v1052
    %1329 = vmatmul.bf16.gmra.mxu0 %v597
    %v1330 = vpop.f32.mrf.mxu0
    %v1331 = vadd.f32 %v1318, %v1330
    %v1332 = vpop.f32.mrf.mxu0
    %1333 = vdwg.mxu0
    %1334 = vmatpush.bf16.msra.mxu0 %v1112
    %1335 = vmatpush.bf16.msra.mxu0 %v1108
    %1336 = vmatpush.bf16.msra.mxu0 %v1104
    %1337 = vmatpush.bf16.msra.mxu0 %v1100
    %1338 = vmatpush.bf16.msra.mxu0 %v1096
    %1339 = vmatpush.bf16.msra.mxu0 %v1092
    %1340 = vmatpush.bf16.msra.mxu0 %v1088
    %1341 = vmatpush.bf16.msra.mxu0 %v1084
    %1342 = vmatmul.bf16.gmra.mxu0 %v598
    %v1343 = vpop.f32.mrf.mxu0
    %v1344 = vadd.f32 %v1331, %v1343
    %v1345 = vpop.f32.mrf.mxu0
    %1346 = vdwg.mxu0
    %1347 = vmatpush.bf16.msra.mxu0 %v1017
    %1348 = vmatpush.bf16.msra.mxu0 %v1013
    %1349 = vmatpush.bf16.msra.mxu0 %v1009
    %1350 = vmatpush.bf16.msra.mxu0 %v1005
    %1351 = vmatpush.bf16.msra.mxu0 %v1001
    %1352 = vmatpush.bf16.msra.mxu0 %v997
    %1353 = vmatpush.bf16.msra.mxu0 %v993
    %1354 = vmatpush.bf16.msra.mxu0 %v989
    %1355 = vmatmul.bf16.gmra.mxu0 %v595
    %v1356 = vpop.f32.mrf.mxu0
    %v1357 = vadd.f32 %v583, %v1356
    %v1358 = vpop.f32.mrf.mxu0
    %1359 = vdwg.mxu0
    %1360 = vmatpush.bf16.msra.mxu0 %v1049
    %1361 = vmatpush.bf16.msra.mxu0 %v1045
    %1362 = vmatpush.bf16.msra.mxu0 %v1041
    %1363 = vmatpush.bf16.msra.mxu0 %v1037
    %1364 = vmatpush.bf16.msra.mxu0 %v1033
    %1365 = vmatpush.bf16.msra.mxu0 %v1029
    %1366 = vmatpush.bf16.msra.mxu0 %v1025
    %1367 = vmatpush.bf16.msra.mxu0 %v1021
    %1368 = vmatmul.bf16.gmra.mxu0 %v596
    %v1369 = vpop.f32.mrf.mxu0
    %v1370 = vadd.f32 %v1357, %v1369
    %v1371 = vpop.f32.mrf.mxu0
    %1372 = vdwg.mxu0
    %1373 = vmatpush.bf16.msra.mxu0 %v1081
    %1374 = vmatpush.bf16.msra.mxu0 %v1077
    %1375 = vmatpush.bf16.msra.mxu0 %v1073
    %1376 = vmatpush.bf16.msra.mxu0 %v1069
    %1377 = vmatpush.bf16.msra.mxu0 %v1065
    %1378 = vmatpush.bf16.msra.mxu0 %v1061
    %1379 = vmatpush.bf16.msra.mxu0 %v1057
    %1380 = vmatpush.bf16.msra.mxu0 %v1053
    %1381 = vmatmul.bf16.gmra.mxu0 %v597
    %v1382 = vpop.f32.mrf.mxu0
    %v1383 = vadd.f32 %v1370, %v1382
    %v1384 = vpop.f32.mrf.mxu0
    %1385 = vdwg.mxu0
    %1386 = vmatpush.bf16.msra.mxu0 %v1113
    %1387 = vmatpush.bf16.msra.mxu0 %v1109
    %1388 = vmatpush.bf16.msra.mxu0 %v1105
    %1389 = vmatpush.bf16.msra.mxu0 %v1101
    %1390 = vmatpush.bf16.msra.mxu0 %v1097
    %1391 = vmatpush.bf16.msra.mxu0 %v1093
    %1392 = vmatpush.bf16.msra.mxu0 %v1089
    %1393 = vmatpush.bf16.msra.mxu0 %v1085
    %1394 = vmatmul.bf16.gmra.mxu0 %v598
    %v1395 = vpop.f32.mrf.mxu0
    %v1396 = vadd.f32 %v1383, %v1395
    %v1397 = vpop.f32.mrf.mxu0
    %1398 = vdwg.mxu0
    %1399 = vmatpush.bf16.msra.mxu0 %v1018
    %1400 = vmatpush.bf16.msra.mxu0 %v1014
    %1401 = vmatpush.bf16.msra.mxu0 %v1010
    %1402 = vmatpush.bf16.msra.mxu0 %v1006
    %1403 = vmatpush.bf16.msra.mxu0 %v1002
    %1404 = vmatpush.bf16.msra.mxu0 %v998
    %1405 = vmatpush.bf16.msra.mxu0 %v994
    %1406 = vmatpush.bf16.msra.mxu0 %v990
    %1407 = vmatmul.bf16.gmra.mxu0 %v595
    %v1408 = vpop.f32.mrf.mxu0
    %v1409 = vadd.f32 %v584, %v1408
    %v1410 = vpop.f32.mrf.mxu0
    %1411 = vdwg.mxu0
    %1412 = vmatpush.bf16.msra.mxu0 %v1050
    %1413 = vmatpush.bf16.msra.mxu0 %v1046
    %1414 = vmatpush.bf16.msra.mxu0 %v1042
    %1415 = vmatpush.bf16.msra.mxu0 %v1038
    %1416 = vmatpush.bf16.msra.mxu0 %v1034
    %1417 = vmatpush.bf16.msra.mxu0 %v1030
    %1418 = vmatpush.bf16.msra.mxu0 %v1026
    %1419 = vmatpush.bf16.msra.mxu0 %v1022
    %1420 = vmatmul.bf16.gmra.mxu0 %v596
    %v1421 = vpop.f32.mrf.mxu0
    %v1422 = vadd.f32 %v1409, %v1421
    %v1423 = vpop.f32.mrf.mxu0
    %1424 = vdwg.mxu0
    %1425 = vmatpush.bf16.msra.mxu0 %v1082
    %1426 = vmatpush.bf16.msra.mxu0 %v1078
    %1427 = vmatpush.bf16.msra.mxu0 %v1074
    %1428 = vmatpush.bf16.msra.mxu0 %v1070
    %1429 = vmatpush.bf16.msra.mxu0 %v1066
    %1430 = vmatpush.bf16.msra.mxu0 %v1062
    %1431 = vmatpush.bf16.msra.mxu0 %v1058
    %1432 = vmatpush.bf16.msra.mxu0 %v1054
    %1433 = vmatmul.bf16.gmra.mxu0 %v597
    %v1434 = vpop.f32.mrf.mxu0
    %v1435 = vadd.f32 %v1422, %v1434
    %v1436 = vpop.f32.mrf.mxu0
    %1437 = vdwg.mxu0
    %1438 = vmatpush.bf16.msra.mxu0 %v1114
    %1439 = vmatpush.bf16.msra.mxu0 %v1110
    %1440 = vmatpush.bf16.msra.mxu0 %v1106
    %1441 = vmatpush.bf16.msra.mxu0 %v1102
    %1442 = vmatpush.bf16.msra.mxu0 %v1098
    %1443 = vmatpush.bf16.msra.mxu0 %v1094
    %1444 = vmatpush.bf16.msra.mxu0 %v1090
    %1445 = vmatpush.bf16.msra.mxu0 %v1086
    %1446 = vmatmul.bf16.gmra.mxu0 %v598
    %v1447 = vpop.f32.mrf.mxu0
    %v1448 = vadd.f32 %v1435, %v1447
    %v1449 = vpop.f32.mrf.mxu0
    %1450 = vdwg.mxu0
    %v1451 = vpack.c.bf16 %v1344, %v1292
    %v1452 = vpack.c.bf16 %v1448, %v1396
    %v1453 = vxor.u32 %v1451, 2147516416
    %v1454 = vxor.u32 %v1452, 2147516416
    %v1455 = vunpack.c.l.bf16 %v1453
    %v1456 = vunpack.c.h.bf16 %v1453
    %v1457 = vunpack.c.l.bf16 %v1454
    %v1458 = vunpack.c.h.bf16 %v1454
    %v1459 = vmul.f32 %v1455, 1.442695
    %v1460 = vpow.pop %v1459
    %v1461 = vmul.f32 %v1456, 1.442695
    %v1462 = vpow.pop %v1461
    %v1463 = vmul.f32 %v1457, 1.442695
    %v1464 = vpow.pop %v1463
    %v1465 = vmul.f32 %v1458, 1.442695
    %v1466 = vpow.pop %v1465
    %v1467 = vpack.c.bf16 %v1462, %v1460
    %v1468 = vpack.c.bf16 %v1466, %v1464
    %v1469 = vunpack.c.l.bf16 %v1467
    %v1470 = vunpack.c.h.bf16 %v1467
    %v1471 = vunpack.c.l.bf16 %v1468
    %v1472 = vunpack.c.h.bf16 %v1468
    %v1473 = vadd.f32 %v1469, 1.0
    %v1474 = vadd.f32 %v1470, 1.0
    %v1475 = vadd.f32 %v1471, 1.0
    %v1476 = vadd.f32 %v1472, 1.0
    %v1477 = vpack.c.bf16 %v1474, %v1473
    %v1478 = vpack.c.bf16 %v1476, %v1475
    %v1479 = vunpack.c.h.bf16 %v1477
    %v1480 = vunpack.c.l.bf16 %v1477
    %v1481 = vrcp.pop %v1479
    %v1482 = vmul.f32 %v421, %v1481
    %v1483 = vrcp.pop %v1480
    %v1484 = vmul.f32 %v422, %v1483
    %v1485 = vpack.c.bf16 %v1482, %v1484
    %v1486 = vunpack.c.h.bf16 %v1478
    %v1487 = vunpack.c.l.bf16 %v1478
    %v1488 = vrcp.pop %v1486
    %v1489 = vmul.f32 %v421, %v1488
    %v1490 = vrcp.pop %v1487
    %v1491 = vmul.f32 %v422, %v1490
    %v1492 = vpack.c.bf16 %v1489, %v1491
    %v1493 = vld [vmem:[#allocation11] sm:$0xff]
    %v1494 = vld [vmem:[#allocation11 + $0x8] sm:$0xff]
    %v1495 = vld [vmem:[#allocation11 + $0x10] sm:$0xff]
    %v1496 = vld [vmem:[#allocation11 + $0x18] sm:$0xff]
    %v1497 = vld [vmem:[#allocation11 + $0x20] sm:$0xff]
    %v1498 = vld [vmem:[#allocation11 + $0x28] sm:$0xff]
    %v1499 = vld [vmem:[#allocation11 + $0x30] sm:$0xff]
    %v1500 = vld [vmem:[#allocation11 + $0x38] sm:$0xff]
    %v1501 = vld [vmem:[#allocation11 + $0x40] sm:$0xff]
    %v1502 = vld [vmem:[#allocation11 + $0x48] sm:$0xff]
    %v1503 = vld [vmem:[#allocation11 + $0x50] sm:$0xff]
    %v1504 = vld [vmem:[#allocation11 + $0x58] sm:$0xff]
    %v1505 = vld [vmem:[#allocation11 + $0x60] sm:$0xff]
    %v1506 = vld [vmem:[#allocation11 + $0x68] sm:$0xff]
    %v1507 = vld [vmem:[#allocation11 + $0x70] sm:$0xff]
    %v1508 = vld [vmem:[#allocation11 + $0x78] sm:$0xff]
    %v1509 = vld [vmem:[#allocation11 + $0x80] sm:$0xff]
    %v1510 = vld [vmem:[#allocation11 + $0x88] sm:$0xff]
    %v1511 = vld [vmem:[#allocation11 + $0x90] sm:$0xff]
    %v1512 = vld [vmem:[#allocation11 + $0x98] sm:$0xff]
    %v1513 = vld [vmem:[#allocation11 + $0xa0] sm:$0xff]
    %v1514 = vld [vmem:[#allocation11 + $0xa8] sm:$0xff]
    %v1515 = vld [vmem:[#allocation11 + $0xb0] sm:$0xff]
    %v1516 = vld [vmem:[#allocation11 + $0xb8] sm:$0xff]
    %v1517 = vld [vmem:[#allocation11 + $0xc0] sm:$0xff]
    %v1518 = vld [vmem:[#allocation11 + $0xc8] sm:$0xff]
    %v1519 = vld [vmem:[#allocation11 + $0xd0] sm:$0xff]
    %v1520 = vld [vmem:[#allocation11 + $0xd8] sm:$0xff]
    %v1521 = vld [vmem:[#allocation11 + $0xe0] sm:$0xff]
    %v1522 = vld [vmem:[#allocation11 + $0xe8] sm:$0xff]
    %v1523 = vld [vmem:[#allocation11 + $0xf0] sm:$0xff]
    %v1524 = vld [vmem:[#allocation11 + $0xf8] sm:$0xff]
    %v1525 = vld [vmem:[#allocation11 + $0x100] sm:$0xff]
    %v1526 = vld [vmem:[#allocation11 + $0x108] sm:$0xff]
    %v1527 = vld [vmem:[#allocation11 + $0x110] sm:$0xff]
    %v1528 = vld [vmem:[#allocation11 + $0x118] sm:$0xff]
    %v1529 = vld [vmem:[#allocation11 + $0x120] sm:$0xff]
    %v1530 = vld [vmem:[#allocation11 + $0x128] sm:$0xff]
    %v1531 = vld [vmem:[#allocation11 + $0x130] sm:$0xff]
    %v1532 = vld [vmem:[#allocation11 + $0x138] sm:$0xff]
    %v1533 = vld [vmem:[#allocation11 + $0x140] sm:$0xff]
    %v1534 = vld [vmem:[#allocation11 + $0x148] sm:$0xff]
    %v1535 = vld [vmem:[#allocation11 + $0x150] sm:$0xff]
    %v1536 = vld [vmem:[#allocation11 + $0x158] sm:$0xff]
    %v1537 = vld [vmem:[#allocation11 + $0x160] sm:$0xff]
    %v1538 = vld [vmem:[#allocation11 + $0x168] sm:$0xff]
    %v1539 = vld [vmem:[#allocation11 + $0x170] sm:$0xff]
    %v1540 = vld [vmem:[#allocation11 + $0x178] sm:$0xff]
    %v1541 = vld [vmem:[#allocation11 + $0x180] sm:$0xff]
    %v1542 = vld [vmem:[#allocation11 + $0x188] sm:$0xff]
    %v1543 = vld [vmem:[#allocation11 + $0x190] sm:$0xff]
    %v1544 = vld [vmem:[#allocation11 + $0x198] sm:$0xff]
    %v1545 = vld [vmem:[#allocation11 + $0x1a0] sm:$0xff]
    %v1546 = vld [vmem:[#allocation11 + $0x1a8] sm:$0xff]
    %v1547 = vld [vmem:[#allocation11 + $0x1b0] sm:$0xff]
    %v1548 = vld [vmem:[#allocation11 + $0x1b8] sm:$0xff]
    %v1549 = vld [vmem:[#allocation11 + $0x1c0] sm:$0xff]
    %v1550 = vld [vmem:[#allocation11 + $0x1c8] sm:$0xff]
    %v1551 = vld [vmem:[#allocation11 + $0x1d0] sm:$0xff]
    %v1552 = vld [vmem:[#allocation11 + $0x1d8] sm:$0xff]
    %v1553 = vld [vmem:[#allocation11 + $0x1e0] sm:$0xff]
    %v1554 = vld [vmem:[#allocation11 + $0x1e8] sm:$0xff]
    %v1555 = vld [vmem:[#allocation11 + $0x1f0] sm:$0xff]
    %v1556 = vld [vmem:[#allocation11 + $0x1f8] sm:$0xff]
    %v1557 = vld [vmem:[%s6] sm:$0x3]
    %v1559 = vperm.slane %v1557, 0
    %v1560 = vperm.slane %v1557, 1
    %v1565 = vunpack.c.l.b16 %v1485
    %v1566 = vunpack.c.h.b16 %v1485
    %v1567 = vunpack.c.l.b16 %v1492
    %v1568 = vunpack.c.h.b16 %v1492
    %v1569 = vpack.c.b16 %v1565, %v1565
    %v1570 = vpack.c.b16 %v1566, %v1566
    %v1571 = vpack.c.b16 %v1567, %v1567
    %v1572 = vpack.c.b16 %v1568, %v1568
    %v1641 = vunpack.c.l.b16 %v1493
    %v1642 = vunpack.c.h.b16 %v1493
    %v1643 = vunpack.c.l.b16 %v1494
    %v1644 = vunpack.c.h.b16 %v1494
    %v1645 = vunpack.c.l.b16 %v1495
    %v1646 = vunpack.c.h.b16 %v1495
    %v1647 = vunpack.c.l.b16 %v1496
    %v1648 = vunpack.c.h.b16 %v1496
    %v1649 = vunpack.c.l.b16 %v1497
    %v1650 = vunpack.c.h.b16 %v1497
    %v1651 = vunpack.c.l.b16 %v1498
    %v1652 = vunpack.c.h.b16 %v1498
    %v1653 = vunpack.c.l.b16 %v1499
    %v1654 = vunpack.c.h.b16 %v1499
    %v1655 = vunpack.c.l.b16 %v1500
    %v1656 = vunpack.c.h.b16 %v1500
    %v1657 = vunpack.c.l.b16 %v1501
    %v1658 = vunpack.c.h.b16 %v1501
    %v1659 = vunpack.c.l.b16 %v1502
    %v1660 = vunpack.c.h.b16 %v1502
    %v1661 = vunpack.c.l.b16 %v1503
    %v1662 = vunpack.c.h.b16 %v1503
    %v1663 = vunpack.c.l.b16 %v1504
    %v1664 = vunpack.c.h.b16 %v1504
    %v1665 = vunpack.c.l.b16 %v1505
    %v1666 = vunpack.c.h.b16 %v1505
    %v1667 = vunpack.c.l.b16 %v1506
    %v1668 = vunpack.c.h.b16 %v1506
    %v1669 = vunpack.c.l.b16 %v1507
    %v1670 = vunpack.c.h.b16 %v1507
    %v1671 = vunpack.c.l.b16 %v1508
    %v1672 = vunpack.c.h.b16 %v1508
    %v1673 = vunpack.c.l.b16 %v1509
    %v1674 = vunpack.c.h.b16 %v1509
    %v1675 = vunpack.c.l.b16 %v1510
    %v1676 = vunpack.c.h.b16 %v1510
    %v1677 = vunpack.c.l.b16 %v1511
    %v1678 = vunpack.c.h.b16 %v1511
    %v1679 = vunpack.c.l.b16 %v1512
    %v1680 = vunpack.c.h.b16 %v1512
    %v1681 = vunpack.c.l.b16 %v1513
    %v1682 = vunpack.c.h.b16 %v1513
    %v1683 = vunpack.c.l.b16 %v1514
    %v1684 = vunpack.c.h.b16 %v1514
    %v1685 = vunpack.c.l.b16 %v1515
    %v1686 = vunpack.c.h.b16 %v1515
    %v1687 = vunpack.c.l.b16 %v1516
    %v1688 = vunpack.c.h.b16 %v1516
    %v1689 = vunpack.c.l.b16 %v1517
    %v1690 = vunpack.c.h.b16 %v1517
    %v1691 = vunpack.c.l.b16 %v1518
    %v1692 = vunpack.c.h.b16 %v1518
    %v1693 = vunpack.c.l.b16 %v1519
    %v1694 = vunpack.c.h.b16 %v1519
    %v1695 = vunpack.c.l.b16 %v1520
    %v1696 = vunpack.c.h.b16 %v1520
    %v1697 = vunpack.c.l.b16 %v1521
    %v1698 = vunpack.c.h.b16 %v1521
    %v1699 = vunpack.c.l.b16 %v1522
    %v1700 = vunpack.c.h.b16 %v1522
    %v1701 = vunpack.c.l.b16 %v1523
    %v1702 = vunpack.c.h.b16 %v1523
    %v1703 = vunpack.c.l.b16 %v1524
    %v1704 = vunpack.c.h.b16 %v1524
    %v1705 = vunpack.c.l.b16 %v1525
    %v1706 = vunpack.c.h.b16 %v1525
    %v1707 = vunpack.c.l.b16 %v1526
    %v1708 = vunpack.c.h.b16 %v1526
    %v1709 = vunpack.c.l.b16 %v1527
    %v1710 = vunpack.c.h.b16 %v1527
    %v1711 = vunpack.c.l.b16 %v1528
    %v1712 = vunpack.c.h.b16 %v1528
    %v1713 = vunpack.c.l.b16 %v1529
    %v1714 = vunpack.c.h.b16 %v1529
    %v1715 = vunpack.c.l.b16 %v1530
    %v1716 = vunpack.c.h.b16 %v1530
    %v1717 = vunpack.c.l.b16 %v1531
    %v1718 = vunpack.c.h.b16 %v1531
    %v1719 = vunpack.c.l.b16 %v1532
    %v1720 = vunpack.c.h.b16 %v1532
    %v1721 = vunpack.c.l.b16 %v1533
    %v1722 = vunpack.c.h.b16 %v1533
    %v1723 = vunpack.c.l.b16 %v1534
    %v1724 = vunpack.c.h.b16 %v1534
    %v1725 = vunpack.c.l.b16 %v1535
    %v1726 = vunpack.c.h.b16 %v1535
    %v1727 = vunpack.c.l.b16 %v1536
    %v1728 = vunpack.c.h.b16 %v1536
    %v1729 = vunpack.c.l.b16 %v1537
    %v1730 = vunpack.c.h.b16 %v1537
    %v1731 = vunpack.c.l.b16 %v1538
    %v1732 = vunpack.c.h.b16 %v1538
    %v1733 = vunpack.c.l.b16 %v1539
    %v1734 = vunpack.c.h.b16 %v1539
    %v1735 = vunpack.c.l.b16 %v1540
    %v1736 = vunpack.c.h.b16 %v1540
    %v1737 = vunpack.c.l.b16 %v1541
    %v1738 = vunpack.c.h.b16 %v1541
    %v1739 = vunpack.c.l.b16 %v1542
    %v1740 = vunpack.c.h.b16 %v1542
    %v1741 = vunpack.c.l.b16 %v1543
    %v1742 = vunpack.c.h.b16 %v1543
    %v1743 = vunpack.c.l.b16 %v1544
    %v1744 = vunpack.c.h.b16 %v1544
    %v1745 = vunpack.c.l.b16 %v1545
    %v1746 = vunpack.c.h.b16 %v1545
    %v1747 = vunpack.c.l.b16 %v1546
    %v1748 = vunpack.c.h.b16 %v1546
    %v1749 = vunpack.c.l.b16 %v1547
    %v1750 = vunpack.c.h.b16 %v1547
    %v1751 = vunpack.c.l.b16 %v1548
    %v1752 = vunpack.c.h.b16 %v1548
    %v1753 = vunpack.c.l.b16 %v1549
    %v1754 = vunpack.c.h.b16 %v1549
    %v1755 = vunpack.c.l.b16 %v1550
    %v1756 = vunpack.c.h.b16 %v1550
    %v1757 = vunpack.c.l.b16 %v1551
    %v1758 = vunpack.c.h.b16 %v1551
    %v1759 = vunpack.c.l.b16 %v1552
    %v1760 = vunpack.c.h.b16 %v1552
    %v1761 = vunpack.c.l.b16 %v1553
    %v1762 = vunpack.c.h.b16 %v1553
    %v1763 = vunpack.c.l.b16 %v1554
    %v1764 = vunpack.c.h.b16 %v1554
    %v1765 = vunpack.c.l.b16 %v1555
    %v1766 = vunpack.c.h.b16 %v1555
    %v1767 = vunpack.c.l.b16 %v1556
    %v1768 = vunpack.c.h.b16 %v1556
    %v1769 = vpack.c.b16 %v1643, %v1641
    %v1770 = vpack.c.b16 %v1644, %v1642
    %v1771 = vpack.c.b16 %v1647, %v1645
    %v1772 = vpack.c.b16 %v1648, %v1646
    %v1773 = vpack.c.b16 %v1651, %v1649
    %v1774 = vpack.c.b16 %v1652, %v1650
    %v1775 = vpack.c.b16 %v1655, %v1653
    %v1776 = vpack.c.b16 %v1656, %v1654
    %v1777 = vpack.c.b16 %v1659, %v1657
    %v1778 = vpack.c.b16 %v1660, %v1658
    %v1779 = vpack.c.b16 %v1663, %v1661
    %v1780 = vpack.c.b16 %v1664, %v1662
    %v1781 = vpack.c.b16 %v1667, %v1665
    %v1782 = vpack.c.b16 %v1668, %v1666
    %v1783 = vpack.c.b16 %v1671, %v1669
    %v1784 = vpack.c.b16 %v1672, %v1670
    %v1785 = vpack.c.b16 %v1675, %v1673
    %v1786 = vpack.c.b16 %v1676, %v1674
    %v1787 = vpack.c.b16 %v1679, %v1677
    %v1788 = vpack.c.b16 %v1680, %v1678
    %v1789 = vpack.c.b16 %v1683, %v1681
    %v1790 = vpack.c.b16 %v1684, %v1682
    %v1791 = vpack.c.b16 %v1687, %v1685
    %v1792 = vpack.c.b16 %v1688, %v1686
    %v1793 = vpack.c.b16 %v1691, %v1689
    %v1794 = vpack.c.b16 %v1692, %v1690
    %v1795 = vpack.c.b16 %v1695, %v1693
    %v1796 = vpack.c.b16 %v1696, %v1694
    %v1797 = vpack.c.b16 %v1699, %v1697
    %v1798 = vpack.c.b16 %v1700, %v1698
    %v1799 = vpack.c.b16 %v1703, %v1701
    %v1800 = vpack.c.b16 %v1704, %v1702
    %v1801 = vpack.c.b16 %v1707, %v1705
    %v1802 = vpack.c.b16 %v1708, %v1706
    %v1803 = vpack.c.b16 %v1711, %v1709
    %v1804 = vpack.c.b16 %v1712, %v1710
    %v1805 = vpack.c.b16 %v1715, %v1713
    %v1806 = vpack.c.b16 %v1716, %v1714
    %v1807 = vpack.c.b16 %v1719, %v1717
    %v1808 = vpack.c.b16 %v1720, %v1718
    %v1809 = vpack.c.b16 %v1723, %v1721
    %v1810 = vpack.c.b16 %v1724, %v1722
    %v1811 = vpack.c.b16 %v1727, %v1725
    %v1812 = vpack.c.b16 %v1728, %v1726
    %v1813 = vpack.c.b16 %v1731, %v1729
    %v1814 = vpack.c.b16 %v1732, %v1730
    %v1815 = vpack.c.b16 %v1735, %v1733
    %v1816 = vpack.c.b16 %v1736, %v1734
    %v1817 = vpack.c.b16 %v1739, %v1737
    %v1818 = vpack.c.b16 %v1740, %v1738
    %v1819 = vpack.c.b16 %v1743, %v1741
    %v1820 = vpack.c.b16 %v1744, %v1742
    %v1821 = vpack.c.b16 %v1747, %v1745
    %v1822 = vpack.c.b16 %v1748, %v1746
    %v1823 = vpack.c.b16 %v1751, %v1749
    %v1824 = vpack.c.b16 %v1752, %v1750
    %v1825 = vpack.c.b16 %v1755, %v1753
    %v1826 = vpack.c.b16 %v1756, %v1754
    %v1827 = vpack.c.b16 %v1759, %v1757
    %v1828 = vpack.c.b16 %v1760, %v1758
    %v1829 = vpack.c.b16 %v1763, %v1761
    %v1830 = vpack.c.b16 %v1764, %v1762
    %v1831 = vpack.c.b16 %v1767, %v1765
    %v1832 = vpack.c.b16 %v1768, %v1766
    %1897 = vmatpush.bf16.msra.mxu0 %v1783
    %1898 = vmatpush.bf16.msra.mxu0 %v1781
    %1899 = vmatpush.bf16.msra.mxu0 %v1779
    %1900 = vmatpush.bf16.msra.mxu0 %v1777
    %1901 = vmatpush.bf16.msra.mxu0 %v1775
    %1902 = vmatpush.bf16.msra.mxu0 %v1773
    %1903 = vmatpush.bf16.msra.mxu0 %v1771
    %1904 = vmatpush.bf16.msra.mxu0 %v1769
    %1905 = vmatmul.bf16.gmra.mxu0 %v1569
    %v1906 = vpop.f32.mrf.mxu0
    %v1907 = vadd.f32 %v1559, %v1906
    %v1908 = vpop.f32.mrf.mxu0
    %1909 = vdwg.mxu0
    %1910 = vmatpush.bf16.msra.mxu0 %v1799
    %1911 = vmatpush.bf16.msra.mxu0 %v1797
    %1912 = vmatpush.bf16.msra.mxu0 %v1795
    %1913 = vmatpush.bf16.msra.mxu0 %v1793
    %1914 = vmatpush.bf16.msra.mxu0 %v1791
    %1915 = vmatpush.bf16.msra.mxu0 %v1789
    %1916 = vmatpush.bf16.msra.mxu0 %v1787
    %1917 = vmatpush.bf16.msra.mxu0 %v1785
    %1918 = vmatmul.bf16.gmra.mxu0 %v1570
    %v1919 = vpop.f32.mrf.mxu0
    %v1920 = vadd.f32 %v1907, %v1919
    %v1921 = vpop.f32.mrf.mxu0
    %1922 = vdwg.mxu0
    %1923 = vmatpush.bf16.msra.mxu0 %v1815
    %1924 = vmatpush.bf16.msra.mxu0 %v1813
    %1925 = vmatpush.bf16.msra.mxu0 %v1811
    %1926 = vmatpush.bf16.msra.mxu0 %v1809
    %1927 = vmatpush.bf16.msra.mxu0 %v1807
    %1928 = vmatpush.bf16.msra.mxu0 %v1805
    %1929 = vmatpush.bf16.msra.mxu0 %v1803
    %1930 = vmatpush.bf16.msra.mxu0 %v1801
    %1931 = vmatmul.bf16.gmra.mxu0 %v1571
    %v1932 = vpop.f32.mrf.mxu0
    %v1933 = vadd.f32 %v1920, %v1932
    %v1934 = vpop.f32.mrf.mxu0
    %1935 = vdwg.mxu0
    %1936 = vmatpush.bf16.msra.mxu0 %v1831
    %1937 = vmatpush.bf16.msra.mxu0 %v1829
    %1938 = vmatpush.bf16.msra.mxu0 %v1827
    %1939 = vmatpush.bf16.msra.mxu0 %v1825
    %1940 = vmatpush.bf16.msra.mxu0 %v1823
    %1941 = vmatpush.bf16.msra.mxu0 %v1821
    %1942 = vmatpush.bf16.msra.mxu0 %v1819
    %1943 = vmatpush.bf16.msra.mxu0 %v1817
    %1944 = vmatmul.bf16.gmra.mxu0 %v1572
    %v1945 = vpop.f32.mrf.mxu0
    %v1946 = vadd.f32 %v1933, %v1945
    %v1947 = vpop.f32.mrf.mxu0
    %1948 = vdwg.mxu0
    %1949 = vmatpush.bf16.msra.mxu0 %v1784
    %1950 = vmatpush.bf16.msra.mxu0 %v1782
    %1951 = vmatpush.bf16.msra.mxu0 %v1780
    %1952 = vmatpush.bf16.msra.mxu0 %v1778
    %1953 = vmatpush.bf16.msra.mxu0 %v1776
    %1954 = vmatpush.bf16.msra.mxu0 %v1774
    %1955 = vmatpush.bf16.msra.mxu0 %v1772
    %1956 = vmatpush.bf16.msra.mxu0 %v1770
    %1957 = vmatmul.bf16.gmra.mxu0 %v1569
    %v1958 = vpop.f32.mrf.mxu0
    %v1959 = vadd.f32 %v1560, %v1958
    %v1960 = vpop.f32.mrf.mxu0
    %1961 = vdwg.mxu0
    %1962 = vmatpush.bf16.msra.mxu0 %v1800
    %1963 = vmatpush.bf16.msra.mxu0 %v1798
    %1964 = vmatpush.bf16.msra.mxu0 %v1796
    %1965 = vmatpush.bf16.msra.mxu0 %v1794
    %1966 = vmatpush.bf16.msra.mxu0 %v1792
    %1967 = vmatpush.bf16.msra.mxu0 %v1790
    %1968 = vmatpush.bf16.msra.mxu0 %v1788
    %1969 = vmatpush.bf16.msra.mxu0 %v1786
    %1970 = vmatmul.bf16.gmra.mxu0 %v1570
    %v1971 = vpop.f32.mrf.mxu0
    %v1972 = vadd.f32 %v1959, %v1971
    %v1973 = vpop.f32.mrf.mxu0
    %1974 = vdwg.mxu0
    %1975 = vmatpush.bf16.msra.mxu0 %v1816
    %1976 = vmatpush.bf16.msra.mxu0 %v1814
    %1977 = vmatpush.bf16.msra.mxu0 %v1812
    %1978 = vmatpush.bf16.msra.mxu0 %v1810
    %1979 = vmatpush.bf16.msra.mxu0 %v1808
    %1980 = vmatpush.bf16.msra.mxu0 %v1806
    %1981 = vmatpush.bf16.msra.mxu0 %v1804
    %1982 = vmatpush.bf16.msra.mxu0 %v1802
    %1983 = vmatmul.bf16.gmra.mxu0 %v1571
    %v1984 = vpop.f32.mrf.mxu0
    %v1985 = vadd.f32 %v1972, %v1984
    %v1986 = vpop.f32.mrf.mxu0
    %1987 = vdwg.mxu0
    %1988 = vmatpush.bf16.msra.mxu0 %v1832
    %1989 = vmatpush.bf16.msra.mxu0 %v1830
    %1990 = vmatpush.bf16.msra.mxu0 %v1828
    %1991 = vmatpush.bf16.msra.mxu0 %v1826
    %1992 = vmatpush.bf16.msra.mxu0 %v1824
    %1993 = vmatpush.bf16.msra.mxu0 %v1822
    %1994 = vmatpush.bf16.msra.mxu0 %v1820
    %1995 = vmatpush.bf16.msra.mxu0 %v1818
    %1996 = vmatmul.bf16.gmra.mxu0 %v1572
    %v1997 = vpop.f32.mrf.mxu0
    %v1998 = vadd.f32 %v1985, %v1997
    %v1999 = vpop.f32.mrf.mxu0
    %2000 = vdwg.mxu0
    %2001 = vst [vmem:[#allocation14] sm:$0xff] %v1946
    %2002 = vst [vmem:[#allocation14 + $0x8] sm:$0xff] %v1998
    %v2003 = vld [vmem:[#allocation13] sm:$0xf]
    %v2004 = vld [vmem:[#allocation13 + $0x4] sm:$0xf]
    %v2005 = vld [vmem:[#allocation13 + $0x8] sm:$0xf]
    %v2006 = vld [vmem:[#allocation13 + $0xc] sm:$0xf]
    %v2007 = vld [vmem:[#allocation13 + $0x10] sm:$0xf]
    %v2008 = vld [vmem:[#allocation13 + $0x14] sm:$0xf]
    %v2009 = vld [vmem:[#allocation13 + $0x18] sm:$0xf]
    %v2010 = vld [vmem:[#allocation13 + $0x1c] sm:$0xf]
    %v2011 = vld [vmem:[#allocation13 + $0x20] sm:$0xf]
    %v2012 = vld [vmem:[#allocation13 + $0x24] sm:$0xf]
    %v2013 = vld [vmem:[#allocation13 + $0x28] sm:$0xf]
    %v2014 = vld [vmem:[#allocation13 + $0x2c] sm:$0xf]
    %v2015 = vld [vmem:[#allocation13 + $0x30] sm:$0xf]
    %v2016 = vld [vmem:[#allocation13 + $0x34] sm:$0xf]
    %v2017 = vld [vmem:[#allocation13 + $0x38] sm:$0xf]
    %v2018 = vld [vmem:[#allocation13 + $0x3c] sm:$0xf]
    %v2019 = vld [vmem:[#allocation13 + $0x40] sm:$0xf]
    %v2020 = vld [vmem:[#allocation13 + $0x44] sm:$0xf]
    %v2021 = vld [vmem:[#allocation13 + $0x48] sm:$0xf]
    %v2022 = vld [vmem:[#allocation13 + $0x4c] sm:$0xf]
    %v2023 = vld [vmem:[#allocation13 + $0x50] sm:$0xf]
    %v2024 = vld [vmem:[#allocation13 + $0x54] sm:$0xf]
    %v2025 = vld [vmem:[#allocation13 + $0x58] sm:$0xf]
    %v2026 = vld [vmem:[#allocation13 + $0x5c] sm:$0xf]
    %v2027 = vld [vmem:[#allocation13 + $0x60] sm:$0xf]
    %v2028 = vld [vmem:[#allocation13 + $0x64] sm:$0xf]
    %v2029 = vld [vmem:[#allocation13 + $0x68] sm:$0xf]
    %v2030 = vld [vmem:[#allocation13 + $0x6c] sm:$0xf]
    %v2031 = vld [vmem:[#allocation13 + $0x70] sm:$0xf]
    %v2032 = vld [vmem:[#allocation13 + $0x74] sm:$0xf]
    %v2033 = vld [vmem:[#allocation13 + $0x78] sm:$0xf]
    %v2034 = vld [vmem:[#allocation13 + $0x7c] sm:$0xf]
    %v2035 = vld [vmem:[#allocation13 + $0x80] sm:$0xf]
    %v2036 = vld [vmem:[#allocation13 + $0x84] sm:$0xf]
    %v2037 = vld [vmem:[#allocation13 + $0x88] sm:$0xf]
    %v2038 = vld [vmem:[#allocation13 + $0x8c] sm:$0xf]
    %v2039 = vld [vmem:[#allocation13 + $0x90] sm:$0xf]
    %v2040 = vld [vmem:[#allocation13 + $0x94] sm:$0xf]
    %v2041 = vld [vmem:[#allocation13 + $0x98] sm:$0xf]
    %v2042 = vld [vmem:[#allocation13 + $0x9c] sm:$0xf]
    %v2043 = vld [vmem:[#allocation13 + $0xa0] sm:$0xf]
    %v2044 = vld [vmem:[#allocation13 + $0xa4] sm:$0xf]
    %v2045 = vld [vmem:[#allocation13 + $0xa8] sm:$0xf]
    %v2046 = vld [vmem:[#allocation13 + $0xac] sm:$0xf]
    %v2047 = vld [vmem:[#allocation13 + $0xb0] sm:$0xf]
    %v2048 = vld [vmem:[#allocation13 + $0xb4] sm:$0xf]
    %v2049 = vld [vmem:[#allocation13 + $0xb8] sm:$0xf]
    %v2050 = vld [vmem:[#allocation13 + $0xbc] sm:$0xf]
    %v2051 = vld [vmem:[#allocation13 + $0xc0] sm:$0xf]
    %v2052 = vld [vmem:[#allocation13 + $0xc4] sm:$0xf]
    %v2053 = vld [vmem:[#allocation13 + $0xc8] sm:$0xf]
    %v2054 = vld [vmem:[#allocation13 + $0xcc] sm:$0xf]
    %v2055 = vld [vmem:[#allocation13 + $0xd0] sm:$0xf]
    %v2056 = vld [vmem:[#allocation13 + $0xd4] sm:$0xf]
    %v2057 = vld [vmem:[#allocation13 + $0xd8] sm:$0xf]
    %v2058 = vld [vmem:[#allocation13 + $0xdc] sm:$0xf]
    %v2059 = vld [vmem:[#allocation13 + $0xe0] sm:$0xf]
    %v2060 = vld [vmem:[#allocation13 + $0xe4] sm:$0xf]
    %v2061 = vld [vmem:[#allocation13 + $0xe8] sm:$0xf]
    %v2062 = vld [vmem:[#allocation13 + $0xec] sm:$0xf]
    %v2063 = vld [vmem:[#allocation13 + $0xf0] sm:$0xf]
    %v2064 = vld [vmem:[#allocation13 + $0xf4] sm:$0xf]
    %v2065 = vld [vmem:[#allocation13 + $0xf8] sm:$0xf]
    %v2066 = vld [vmem:[#allocation13 + $0xfc] sm:$0xf]
    %v2067 = vld [vmem:[%s8] sm:$0x1]
    %v2069 = vperm.slane %v2067, 0
    %v2073 = vunpack.c.l.b16 %v443
    %v2074 = vunpack.c.h.b16 %v443
    %v2075 = vunpack.c.l.b16 %v450
    %v2076 = vunpack.c.h.b16 %v450
    %v2077 = vpack.c.b16 %v2073, %v2073
    %v2078 = vpack.c.b16 %v2074, %v2074
    %v2079 = vpack.c.b16 %v2075, %v2075
    %v2080 = vpack.c.b16 %v2076, %v2076
    %v2149 = vunpack.c.l.b16 %v2003
    %v2150 = vunpack.c.l.b16 %v2004
    %v2151 = vunpack.c.l.b16 %v2005
    %v2152 = vunpack.c.l.b16 %v2006
    %v2153 = vunpack.c.l.b16 %v2007
    %v2154 = vunpack.c.l.b16 %v2008
    %v2155 = vunpack.c.l.b16 %v2009
    %v2156 = vunpack.c.l.b16 %v2010
    %v2157 = vunpack.c.l.b16 %v2011
    %v2158 = vunpack.c.l.b16 %v2012
    %v2159 = vunpack.c.l.b16 %v2013
    %v2160 = vunpack.c.l.b16 %v2014
    %v2161 = vunpack.c.l.b16 %v2015
    %v2162 = vunpack.c.l.b16 %v2016
    %v2163 = vunpack.c.l.b16 %v2017
    %v2164 = vunpack.c.l.b16 %v2018
    %v2165 = vunpack.c.l.b16 %v2019
    %v2166 = vunpack.c.l.b16 %v2020
    %v2167 = vunpack.c.l.b16 %v2021
    %v2168 = vunpack.c.l.b16 %v2022
    %v2169 = vunpack.c.l.b16 %v2023
    %v2170 = vunpack.c.l.b16 %v2024
    %v2171 = vunpack.c.l.b16 %v2025
    %v2172 = vunpack.c.l.b16 %v2026
    %v2173 = vunpack.c.l.b16 %v2027
    %v2174 = vunpack.c.l.b16 %v2028
    %v2175 = vunpack.c.l.b16 %v2029
    %v2176 = vunpack.c.l.b16 %v2030
    %v2177 = vunpack.c.l.b16 %v2031
    %v2178 = vunpack.c.l.b16 %v2032
    %v2179 = vunpack.c.l.b16 %v2033
    %v2180 = vunpack.c.l.b16 %v2034
    %v2181 = vunpack.c.l.b16 %v2035
    %v2182 = vunpack.c.l.b16 %v2036
    %v2183 = vunpack.c.l.b16 %v2037
    %v2184 = vunpack.c.l.b16 %v2038
    %v2185 = vunpack.c.l.b16 %v2039
    %v2186 = vunpack.c.l.b16 %v2040
    %v2187 = vunpack.c.l.b16 %v2041
    %v2188 = vunpack.c.l.b16 %v2042
    %v2189 = vunpack.c.l.b16 %v2043
    %v2190 = vunpack.c.l.b16 %v2044
    %v2191 = vunpack.c.l.b16 %v2045
    %v2192 = vunpack.c.l.b16 %v2046
    %v2193 = vunpack.c.l.b16 %v2047
    %v2194 = vunpack.c.l.b16 %v2048
    %v2195 = vunpack.c.l.b16 %v2049
    %v2196 = vunpack.c.l.b16 %v2050
    %v2197 = vunpack.c.l.b16 %v2051
    %v2198 = vunpack.c.l.b16 %v2052
    %v2199 = vunpack.c.l.b16 %v2053
    %v2200 = vunpack.c.l.b16 %v2054
    %v2201 = vunpack.c.l.b16 %v2055
    %v2202 = vunpack.c.l.b16 %v2056
    %v2203 = vunpack.c.l.b16 %v2057
    %v2204 = vunpack.c.l.b16 %v2058
    %v2205 = vunpack.c.l.b16 %v2059
    %v2206 = vunpack.c.l.b16 %v2060
    %v2207 = vunpack.c.l.b16 %v2061
    %v2208 = vunpack.c.l.b16 %v2062
    %v2209 = vunpack.c.l.b16 %v2063
    %v2210 = vunpack.c.l.b16 %v2064
    %v2211 = vunpack.c.l.b16 %v2065
    %v2212 = vunpack.c.l.b16 %v2066
    %v2213 = vpack.c.b16 %v2150, %v2149
    %v2214 = vpack.c.b16 %v2152, %v2151
    %v2215 = vpack.c.b16 %v2154, %v2153
    %v2216 = vpack.c.b16 %v2156, %v2155
    %v2217 = vpack.c.b16 %v2158, %v2157
    %v2218 = vpack.c.b16 %v2160, %v2159
    %v2219 = vpack.c.b16 %v2162, %v2161
    %v2220 = vpack.c.b16 %v2164, %v2163
    %v2221 = vpack.c.b16 %v2166, %v2165
    %v2222 = vpack.c.b16 %v2168, %v2167
    %v2223 = vpack.c.b16 %v2170, %v2169
    %v2224 = vpack.c.b16 %v2172, %v2171
    %v2225 = vpack.c.b16 %v2174, %v2173
    %v2226 = vpack.c.b16 %v2176, %v2175
    %v2227 = vpack.c.b16 %v2178, %v2177
    %v2228 = vpack.c.b16 %v2180, %v2179
    %v2229 = vpack.c.b16 %v2182, %v2181
    %v2230 = vpack.c.b16 %v2184, %v2183
    %v2231 = vpack.c.b16 %v2186, %v2185
    %v2232 = vpack.c.b16 %v2188, %v2187
    %v2233 = vpack.c.b16 %v2190, %v2189
    %v2234 = vpack.c.b16 %v2192, %v2191
    %v2235 = vpack.c.b16 %v2194, %v2193
    %v2236 = vpack.c.b16 %v2196, %v2195
    %v2237 = vpack.c.b16 %v2198, %v2197
    %v2238 = vpack.c.b16 %v2200, %v2199
    %v2239 = vpack.c.b16 %v2202, %v2201
    %v2240 = vpack.c.b16 %v2204, %v2203
    %v2241 = vpack.c.b16 %v2206, %v2205
    %v2242 = vpack.c.b16 %v2208, %v2207
    %v2243 = vpack.c.b16 %v2210, %v2209
    %v2244 = vpack.c.b16 %v2212, %v2211
    %2277 = vmatpush.bf16.msra.mxu0 %v2220
    %2278 = vmatpush.bf16.msra.mxu0 %v2219
    %2279 = vmatpush.bf16.msra.mxu0 %v2218
    %2280 = vmatpush.bf16.msra.mxu0 %v2217
    %2281 = vmatpush.bf16.msra.mxu0 %v2216
    %2282 = vmatpush.bf16.msra.mxu0 %v2215
    %2283 = vmatpush.bf16.msra.mxu0 %v2214
    %2284 = vmatpush.bf16.msra.mxu0 %v2213
    %2285 = vmatmul.bf16.gmra.mxu0 %v2077
    %v2286 = vpop.f32.mrf.mxu0
    %v2287 = vadd.f32 %v2069, %v2286
    %v2288 = vpop.f32.mrf.mxu0
    %2289 = vdwg.mxu0
    %2290 = vmatpush.bf16.msra.mxu0 %v2228
    %2291 = vmatpush.bf16.msra.mxu0 %v2227
    %2292 = vmatpush.bf16.msra.mxu0 %v2226
    %2293 = vmatpush.bf16.msra.mxu0 %v2225
    %2294 = vmatpush.bf16.msra.mxu0 %v2224
    %2295 = vmatpush.bf16.msra.mxu0 %v2223
    %2296 = vmatpush.bf16.msra.mxu0 %v2222
    %2297 = vmatpush.bf16.msra.mxu0 %v2221
    %2298 = vmatmul.bf16.gmra.mxu0 %v2078
    %v2299 = vpop.f32.mrf.mxu0
    %v2300 = vadd.f32 %v2287, %v2299
    %v2301 = vpop.f32.mrf.mxu0
    %2302 = vdwg.mxu0
    %2303 = vmatpush.bf16.msra.mxu0 %v2236
    %2304 = vmatpush.bf16.msra.mxu0 %v2235
    %2305 = vmatpush.bf16.msra.mxu0 %v2234
    %2306 = vmatpush.bf16.msra.mxu0 %v2233
    %2307 = vmatpush.bf16.msra.mxu0 %v2232
    %2308 = vmatpush.bf16.msra.mxu0 %v2231
    %2309 = vmatpush.bf16.msra.mxu0 %v2230
    %2310 = vmatpush.bf16.msra.mxu0 %v2229
    %2311 = vmatmul.bf16.gmra.mxu0 %v2079
    %v2312 = vpop.f32.mrf.mxu0
    %v2313 = vadd.f32 %v2300, %v2312
    %v2314 = vpop.f32.mrf.mxu0
    %2315 = vdwg.mxu0
    %2316 = vmatpush.bf16.msra.mxu0 %v2244
    %2317 = vmatpush.bf16.msra.mxu0 %v2243
    %2318 = vmatpush.bf16.msra.mxu0 %v2242
    %2319 = vmatpush.bf16.msra.mxu0 %v2241
    %2320 = vmatpush.bf16.msra.mxu0 %v2240
    %2321 = vmatpush.bf16.msra.mxu0 %v2239
    %2322 = vmatpush.bf16.msra.mxu0 %v2238
    %2323 = vmatpush.bf16.msra.mxu0 %v2237
    %2324 = vmatmul.bf16.gmra.mxu0 %v2080
    %v2325 = vpop.f32.mrf.mxu0
    %v2326 = vadd.f32 %v2313, %v2325
    %v2327 = vpop.f32.mrf.mxu0
    %2328 = vdwg.mxu0
    %2329 = vst [vmem:[#allocation15] sm:$0xff] %v2326
    // Predicated region
    $region66: #{tpu_custom_call.1} parent=1 // pred_check
      _
    $region67: #{tpu_custom_call.1} parent=1 // pred_check_branch
      %2331 = sbr.rel (0) target = $region69
    $region68: #{tpu_custom_call.1} parent=1 // pred_region
      %2333 = vsyncadd [#allocation4], 0
      %s2335 = sshll.u32 [#allocation14], 4
      %s2336 = int_to_ptr.vmem [resolvable:$true] %s2335
      %s2337 = sshll.u32 %s9, 4
      %s2338 = int_to_ptr.hbm [resolvable:$true] %s2337
      %2340 = dma.vmem_to_hbm [thread:$0]  %s2336, 256, %s2338, [#allocation4]
    $region69: #{tpu_custom_call.1} parent=1 // pred_fallthru
      _
    // Predicated region
    $region70: #{tpu_custom_call.1} parent=1 // pred_check
      _
    $region71: #{tpu_custom_call.1} parent=1 // pred_check_branch
      %2342 = sbr.rel (0) target = $region73
    $region72: #{tpu_custom_call.1} parent=1 // pred_region
      %2344 = vsyncadd [#allocation16], 0
      %s2346 = sshll.u32 [#allocation15], 4
      %s2347 = int_to_ptr.vmem [resolvable:$true] %s2346
      %s2348 = sshll.u32 %s10, 4
      %s2349 = int_to_ptr.hbm [resolvable:$true] %s2348
      %2351 = dma.vmem_to_hbm [thread:$0]  %s2347, 128, %s2349, [#allocation16]
    $region73: #{tpu_custom_call.1} parent=1 // pred_fallthru
      _
    // Predicated region
    $region74: #{tpu_custom_call.1} parent=1 // pred_check
      _
    $region75: #{tpu_custom_call.1} parent=1 // pred_check_branch
      %2353 = sbr.rel (0) target = $region77
    $region76: #{tpu_custom_call.1} parent=1 // pred_region
      %2355 = dma.done [#allocation4], 256
    $region77: #{tpu_custom_call.1} parent=1 // pred_fallthru
      _
    // Predicated region
    $region78: #{tpu_custom_call.1} parent=1 // pred_check
      _
    $region79: #{tpu_custom_call.1} parent=1 // pred_check_branch
      %2357 = sbr.rel (0) target = $region81
    $region80: #{tpu_custom_call.1} parent=1 // pred_region
      %2359 = dma.done [#allocation16], 128
    $region81: #{tpu_custom_call.1} parent=1 // pred_fallthru
      _
    %2360 = vsyncpa [#allocation3], 1
    %2361 = vsyncpa [#allocation6], 1
    %2362 = vsyncpa [#allocation9], 1
    %2363 = vsyncpa [#allocation12], 1
    %2364 = vsyncpa [#allocation4], 1
    %2365 = vsyncpa [#allocation16], 1

</llo_original>
